<compile_context>
chip_gen: v7x
topology: tpu7x:2x2x1
jax: 0.10.0
libtpu: 0.0.40
codegen_flags: <defaults>
</compile_context>

<pallas_src>
import jax
import jax.numpy as jnp
from jax.experimental import pallas as pl
from jax.experimental.pallas import tpu as pltpu


# ----------------------------------------------------------------------------
# Fused conv stack (Conv2d 'same' + BN(eval) + ReLU per layer) + hoisted
# bidirectional-LSTM input projection.  Activations are channels-last
# flattened: (B, T, E*C).  One grid step processes a batch tile of Bblk rows.
# ----------------------------------------------------------------------------
def _make_conv_stack_proj_kernel(layer_dims, kh, ph, bblk, t_len):
    n_layers = len(layer_dims)

    def kernel(x_ref, *refs):
        # refs = [w_0, sc_0, sh_0, ..., w_{L-1}, sc_{L-1}, sh_{L-1},
        #         wih, bias, g_out]
        g_ref = refs[-1]
        wih_ref = refs[3 * n_layers]
        bias_ref = refs[3 * n_layers + 1]
        T = t_len

        y = None                                      # (bblk*T, D) activations
        for l in range(n_layers):
            w_ref = refs[3 * l]                        # (kh*Din, Dout) bf16
            sc_ref = refs[3 * l + 1]                   # (1, Dout) f32
            sh_ref = refs[3 * l + 2]                   # (1, Dout) f32
            din, _ = layer_dims[l]

            # In-kernel 'same' zero padding in time + im2col over the kh taps,
            # flattened over the batch tile so the matmul M dim is bblk*T.
            zrow = jnp.zeros((ph, din), jnp.float32)
            rows = []
            for b in range(bblk):
                a = x_ref[b] if l == 0 else y[b * T:(b + 1) * T, :]
                ap = jnp.concatenate([zrow, a, zrow], axis=0)    # (T+2ph, Din)
                taps = [ap[dt:dt + T, :] for dt in range(kh)]
                rows.append(jnp.concatenate(taps, axis=-1))      # (T, kh*Din)
            x2 = rows[0] if bblk == 1 else jnp.concatenate(rows, axis=0)

            acc = jnp.dot(x2.astype(jnp.bfloat16), w_ref[...],
                          preferred_element_type=jnp.float32)    # (bblk*T, Dout)
            y = jnp.maximum(acc * sc_ref[...] + sh_ref[...], 0.0)  # BN + ReLU

        # Hoisted bi-LSTM input projection for BOTH directions (8H lanes),
        # biases folded in.  Output stays lane-dense (G = 8H).
        g = (jnp.dot(y.astype(jnp.bfloat16), wih_ref[...],
                     preferred_element_type=jnp.float32) + bias_ref[...])
        for b in range(bblk):
            g_ref[b] = g[b * T:(b + 1) * T, :]

    return kernel


def conv_stack_proj(x, layer_params, wih_comb, bias_comb, kh, bblk):
    """x: (B, T, E) -> LSTM gate pre-activations (B, T, 8H)."""
    B, T, E = x.shape
    ph = kh // 2
    layer_dims = [(w.shape[0] // kh, w.shape[1]) for (w, _, _) in layer_params]
    G = wih_comb.shape[1]

    kernel = _make_conv_stack_proj_kernel(layer_dims, kh, ph, bblk, T)

    inputs = [x]
    in_specs = [pl.BlockSpec((bblk, T, E), lambda i: (i, 0, 0))]
    for (w, sc, sh) in layer_params:
        inputs += [w, sc, sh]
        in_specs += [pl.BlockSpec(w.shape, lambda i: (0, 0)),
                     pl.BlockSpec(sc.shape, lambda i: (0, 0)),
                     pl.BlockSpec(sh.shape, lambda i: (0, 0))]
    inputs += [wih_comb, bias_comb]
    in_specs += [pl.BlockSpec(wih_comb.shape, lambda i: (0, 0)),
                 pl.BlockSpec(bias_comb.shape, lambda i: (0, 0))]

    return pl.pallas_call(
        kernel,
        out_shape=jax.ShapeDtypeStruct((B, T, G), jnp.float32),
        grid=(B // bblk,),
        in_specs=in_specs,
        out_specs=pl.BlockSpec((bblk, T, G), lambda i: (i, 0, 0)),
        compiler_params=pltpu.CompilerParams(dimension_semantics=("parallel",)),
    )(*inputs)


# ----------------------------------------------------------------------------
# Fused bidirectional LSTM: single grid step, in-kernel fori_loop over time.
# Gate column layout (blocks of width H): [i_f, i_b, f_f, f_b, g_f, g_b, o_f, o_b]
# h/c packed as (B, 2H) = [fwd H | bwd H].
# ----------------------------------------------------------------------------
def _make_bilstm_kernel(T, B, H):
    G = 8 * H
    H2 = 2 * H

    def kernel(gx_ref, whh_ref, out_ref, hn_ref, cn_ref):
        # gx_ref: (B, T, 8H) x-projections (biases folded);  whh_ref: (2H, 8H)
        # out_ref: (T, B, 2H);  hn_ref / cn_ref: (2, B, H)
        whh = whh_ref[...]                                      # hoisted
        col = jax.lax.broadcasted_iota(jnp.int32, (1, G), 1)
        is_fwd = ((col // H) % 2) == 0                          # hoisted mask

        def step(s, carry):
            h, c = carry                                        # (B, 2H) f32
            # fwd gate columns read time s, bwd columns read time T-1-s
            rows = []
            for b in range(B):
                rf = gx_ref[b, pl.ds(s, 1), :]                  # (1, G)
                rb = gx_ref[b, pl.ds(T - 1 - s, 1), :]          # (1, G)
                rows.append(jnp.where(is_fwd, rf, rb))
            gx = rows[0] if B == 1 else jnp.concatenate(rows, axis=0)  # (B, G)

            gates = gx + jnp.dot(h.astype(jnp.bfloat16), whh,
                                 preferred_element_type=jnp.float32)   # (B, 8H)
            sg = jax.nn.sigmoid(gates)                          # full-width EUP
            th = jnp.tanh(gates)
            i = sg[:, 0 * H2:1 * H2]
            f = sg[:, 1 * H2:2 * H2]
            g = th[:, 2 * H2:3 * H2]
            o = sg[:, 3 * H2:4 * H2]
            c_new = f * c + i * g
            h_new = o * jnp.tanh(c_new)

            # forward half -> time s ; backward half -> time T-1-s
            out_ref[pl.ds(s, 1), :, 0:H] = h_new[None, :, 0:H]
            out_ref[pl.ds(T - 1 - s, 1), :, H:H2] = h_new[None, :, H:H2]
            return h_new, c_new

        h0 = jnp.zeros((B, H2), jnp.float32)
        c0 = jnp.zeros((B, H2), jnp.float32)
        h_fin, c_fin = jax.lax.fori_loop(0, T, step, (h0, c0))

        hn_ref[0] = h_fin[:, 0:H]
        hn_ref[1] = h_fin[:, H:H2]
        cn_ref[0] = c_fin[:, 0:H]
        cn_ref[1] = c_fin[:, H:H2]

    return kernel


def bilstm(gates_x, whh_bd, rnn_units):
    """gates_x: (B, T, 8H) -> (out (T,B,2H), h_n (2,B,H), c_n (2,B,H))."""
    B, T, G = gates_x.shape
    H = rnn_units
    kernel = _make_bilstm_kernel(T, B, H)
    return pl.pallas_call(
        kernel,
        out_shape=(jax.ShapeDtypeStruct((T, B, 2 * H), jnp.float32),
                   jax.ShapeDtypeStruct((2, B, H), jnp.float32),
                   jax.ShapeDtypeStruct((2, B, H), jnp.float32)),
        grid=(1,),
        in_specs=[pl.BlockSpec((B, T, G), lambda i: (0, 0, 0)),
                  pl.BlockSpec(whh_bd.shape, lambda i: (0, 0))],
        out_specs=[pl.BlockSpec((T, B, 2 * H), lambda i: (0, 0, 0)),
                   pl.BlockSpec((2, B, H), lambda i: (0, 0, 0)),
                   pl.BlockSpec((2, B, H), lambda i: (0, 0, 0))],
        compiler_params=pltpu.CompilerParams(dimension_semantics=("arbitrary",)),
    )(gates_x, whh_bd)


# ----------------------------------------------------------------------------
# Parameter preprocessing (pure JAX, once at init)
# ----------------------------------------------------------------------------
def make_banded_conv_weight(w, E):
    """w: (Cout, Cin, kh, kw) -> (kh, E*Cin, E*Cout).  The E ('same' padded)
    axis of the conv is folded into a banded matrix so each kh-tap becomes one
    (T, E*Cin) @ (E*Cin, E*Cout) matmul."""
    Cout, Cin, kh, kw = w.shape
    pw = kw // 2
    e_in = jnp.arange(E)[:, None]
    e_out = jnp.arange(E)[None, :]
    de = e_in - e_out + pw                                   # (E, E)
    valid = (de >= 0) & (de < kw)
    de_c = jnp.clip(de, 0, kw - 1)
    wt = jnp.transpose(w, (2, 3, 1, 0))                      # (kh, kw, Cin, Cout)
    band = wt[:, de_c]                                       # (kh, E, E, Cin, Cout)
    band = band * valid[None, :, :, None, None].astype(w.dtype)
    band = jnp.transpose(band, (0, 1, 3, 2, 4))              # (kh, E, Cin, E, Cout)
    return band.reshape(kh, E * Cin, E * Cout)


def _interleave_gates(wf, wb, H):
    """Interleave per-gate blocks of two (..., 4H) arrays -> (..., 8H) with
    layout [i_f, i_b, f_f, f_b, g_f, g_b, o_f, o_b]."""
    parts = []
    for gi in range(4):
        parts.append(wf[..., gi * H:(gi + 1) * H])
        parts.append(wb[..., gi * H:(gi + 1) * H])
    return jnp.concatenate(parts, axis=-1)


# ----------------------------------------------------------------------------
# Encoder: embeddings -> fused conv stack + Wih projection -> fused bi-LSTM
# ----------------------------------------------------------------------------
class EncoderPallas:
    def __init__(self, key, vocab=20, emb_dim=32, conv_channels=(8, 8, 1),
                 kernel_size=5, rnn_units=16):
        self.emb_dim = emb_dim
        self.rnn_units = rnn_units
        self.kernel_size = kernel_size
        ks = jax.random.split(key, 16)
        k_it = iter(ks)

        # character embedding table
        self.emb_table = 0.1 * jax.random.normal(next(k_it), (vocab, emb_dim),
                                                 jnp.float32)

        # conv layers: Conv2d + BatchNorm2d(eval) + ReLU; dropout -> identity
        eps = 1e-5
        self.conv_layers = []
        cin = 1
        for cout in conv_channels:
            w = 0.1 * jax.random.normal(next(k_it),
                                        (cout, cin, kernel_size, kernel_size),
                                        jnp.float32)
            b = 0.01 * jax.random.normal(next(k_it), (cout,), jnp.float32)
            gamma = jnp.ones((cout,), jnp.float32)   # fresh-module BN defaults
            beta = jnp.zeros((cout,), jnp.float32)
            mean = jnp.zeros((cout,), jnp.float32)
            var = jnp.ones((cout,), jnp.float32)
            scale = gamma / jnp.sqrt(var + eps)
            shift = (b - mean) * scale + beta
            band = make_banded_conv_weight(w, emb_dim)     # (kh, E*cin, E*cout)
            # K-fused im2col weight: (kh*E*cin, E*cout), bf16 for the MXU
            w_flat = band.reshape(kernel_size * emb_dim * cin,
                                  emb_dim * cout).astype(jnp.bfloat16)
            scale_row = jnp.tile(scale, emb_dim).reshape(1, emb_dim * cout)
            shift_row = jnp.tile(shift, emb_dim).reshape(1, emb_dim * cout)
            self.conv_layers.append((w_flat, scale_row, shift_row))
            cin = cout

        # bidirectional LSTM, 1 layer; PyTorch gate order (i, f, g, o)
        d_in = conv_channels[-1] * emb_dim
        H = rnn_units

        def lstm_dir_params(k):
            k1, k2, k3, k4 = jax.random.split(k, 4)
            wih = 0.1 * jax.random.normal(k1, (4 * H, d_in), jnp.float32)
            whh = 0.1 * jax.random.normal(k2, (4 * H, H), jnp.float32)
            bih = 0.01 * jax.random.normal(k3, (4 * H,), jnp.float32)
            bhh = 0.01 * jax.random.normal(k4, (4 * H,), jnp.float32)
            return wih.T, whh.T, bih + bhh           # (D,4H), (H,4H), (4H,)

        wih_f, whh_f, bias_f = lstm_dir_params(next(k_it))
        wih_b, whh_b, bias_b = lstm_dir_params(next(k_it))

        # hoisted input projection for BOTH directions (8H lanes), bf16
        self.wih_comb = _interleave_gates(wih_f, wih_b, H).astype(jnp.bfloat16)
        self.bias_comb = _interleave_gates(bias_f, bias_b, H).reshape(1, 8 * H)
        # block-diagonal recurrent weight over packed [h_f | h_b], bf16
        top = _interleave_gates(whh_f, jnp.zeros_like(whh_f), H)      # (H, 8H)
        bot = _interleave_gates(jnp.zeros_like(whh_b), whh_b, H)      # (H, 8H)
        self.whh_bd = jnp.concatenate([top, bot], axis=0).astype(jnp.bfloat16)

    @staticmethod
    def _pick_batch_block(B, T):
        # Raise the conv matmul M dim toward ~256 rows (Bblk*T) while keeping
        # >= 2 parallel grid steps when B >= 2 (megacore / v7x second core).
        target = max(1, 256 // max(T, 1))
        bblk = max(1, min(B, target))
        if B >= 2:
            bblk = min(bblk, max(1, B // 2))
        while B % bblk:
            bblk -= 1
        return max(bblk, 1)

    def __call__(self, input_character_indices):
        B, T = input_character_indices.shape
        # embedding lookup (gather glue): (B,T) -> (B,T,E); with Cin=1 this is
        # already the channels-last flattened (B, T, E*C) layout.
        x = jnp.take(self.emb_table, input_character_indices, axis=0)

        bblk = self._pick_batch_block(B, T)
        # whole conv stack + hoisted LSTM input projection in one pallas_call
        gates_x = conv_stack_proj(x, self.conv_layers, self.wih_comb,
                                  self.bias_comb, self.kernel_size, bblk)

        # fused bidirectional recurrence: single (T, B, 2H) output, final states
        encoder_output, h_n, c_n = bilstm(gates_x, self.whh_bd, self.rnn_units)
        return encoder_output, (h_n, c_n)


if __name__ == "__main__":
    key = jax.random.PRNGKey(0)
    k_param, k_idx = jax.random.split(key)

    B, T = 2, 8
    VOCAB, EMB, RNN = 20, 32, 16
    enc = EncoderPallas(k_param, vocab=VOCAB, emb_dim=EMB,
                        conv_channels=(8, 8, 1), kernel_size=5, rnn_units=RNN)

    idx = jax.random.randint(k_idx, (B, T), 0, VOCAB, dtype=jnp.int32)

    out, (h_n, c_n) = enc(idx)
    jax.block_until_ready((out, h_n, c_n))

    assert out.shape == (T, B, 2 * RNN)
    assert h_n.shape == (2, B, RNN)
    assert c_n.shape == (2, B, RNN)
    assert bool(jnp.all(jnp.isfinite(out)))
    assert bool(jnp.all(jnp.isfinite(h_n))) and bool(jnp.all(jnp.isfinite(c_n)))
    print("KERNEL_OK")
</pallas_src>

<mosaic_0001>
module attributes {stable_mosaic.version = 11 : i64} {
  func.func @kernel(%arg0: i32, %arg1: memref<1x8x32xf32, #tpu.memory_space<vmem>>, %arg2: memref<160x256xbf16, #tpu.memory_space<vmem>>, %arg3: memref<1x256xf32, #tpu.memory_space<vmem>>, %arg4: memref<1x256xf32, #tpu.memory_space<vmem>>, %arg5: memref<1280x256xbf16, #tpu.memory_space<vmem>>, %arg6: memref<1x256xf32, #tpu.memory_space<vmem>>, %arg7: memref<1x256xf32, #tpu.memory_space<vmem>>, %arg8: memref<1280x32xbf16, #tpu.memory_space<vmem>>, %arg9: memref<1x32xf32, #tpu.memory_space<vmem>>, %arg10: memref<1x32xf32, #tpu.memory_space<vmem>>, %arg11: memref<32x128xbf16, #tpu.memory_space<vmem>>, %arg12: memref<1x128xf32, #tpu.memory_space<vmem>>, %arg13: memref<1x8x128xf32, #tpu.memory_space<vmem>>) attributes {dimension_semantics = [#tpu.dimension_semantics<parallel>], iteration_bounds = array<i64: 2>, scalar_prefetch = 0 : i64, scratch_operands = 0 : i64, tpu.core_type = #tpu.core_type<tc>, window_params = [{transform_indices = @transform_0, window_bounds = array<i64: 1, 8, 32>}, {pipeline_mode = #tpu.pipeline_mode<synchronous>, transform_indices = @transform_1, window_bounds = array<i64: 160, 256>}, {pipeline_mode = #tpu.pipeline_mode<synchronous>, transform_indices = @transform_2, window_bounds = array<i64: 1, 256>}, {pipeline_mode = #tpu.pipeline_mode<synchronous>, transform_indices = @transform_3, window_bounds = array<i64: 1, 256>}, {pipeline_mode = #tpu.pipeline_mode<synchronous>, transform_indices = @transform_4, window_bounds = array<i64: 1280, 256>}, {pipeline_mode = #tpu.pipeline_mode<synchronous>, transform_indices = @transform_5, window_bounds = array<i64: 1, 256>}, {pipeline_mode = #tpu.pipeline_mode<synchronous>, transform_indices = @transform_6, window_bounds = array<i64: 1, 256>}, {pipeline_mode = #tpu.pipeline_mode<synchronous>, transform_indices = @transform_7, window_bounds = array<i64: 1280, 32>}, {pipeline_mode = #tpu.pipeline_mode<synchronous>, transform_indices = @transform_8, window_bounds = array<i64: 1, 32>}, {pipeline_mode = #tpu.pipeline_mode<synchronous>, transform_indices = @transform_9, window_bounds = array<i64: 1, 32>}, {pipeline_mode = #tpu.pipeline_mode<synchronous>, transform_indices = @transform_10, window_bounds = array<i64: 32, 128>}, {pipeline_mode = #tpu.pipeline_mode<synchronous>, transform_indices = @transform_11, window_bounds = array<i64: 1, 128>}, {transform_indices = @transform_12, window_bounds = array<i64: 1, 8, 128>}]} {
    %cst = arith.constant 0.000000e+00 : f32
    %0 = vector.broadcast %cst : f32 to vector<2x32xf32>
    %c0 = arith.constant 0 : index
    %c0_0 = arith.constant 0 : index
    %c0_1 = arith.constant 0 : index
    %1 = vector.load %arg1[%c0, %c0_0, %c0_1] : memref<1x8x32xf32, #tpu.memory_space<vmem>>, vector<1x8x32xf32>
    %2 = vector.shape_cast %1 : vector<1x8x32xf32> to vector<8x32xf32>
    %3 = tpu.concatenate %0, %2, %0 in 0 : vector<2x32xf32>, vector<8x32xf32>, vector<2x32xf32> -> vector<12x32xf32>
    %4 = vector.extract_strided_slice %3 {offsets = [0, 0], sizes = [8, 32], strides = [1, 1]} : vector<12x32xf32> to vector<8x32xf32>
    %5 = vector.extract_strided_slice %3 {offsets = [1, 0], sizes = [8, 32], strides = [1, 1]} : vector<12x32xf32> to vector<8x32xf32>
    %6 = vector.extract_strided_slice %3 {offsets = [2, 0], sizes = [8, 32], strides = [1, 1]} : vector<12x32xf32> to vector<8x32xf32>
    %7 = vector.extract_strided_slice %3 {offsets = [3, 0], sizes = [8, 32], strides = [1, 1]} : vector<12x32xf32> to vector<8x32xf32>
    %8 = vector.extract_strided_slice %3 {offsets = [4, 0], sizes = [8, 32], strides = [1, 1]} : vector<12x32xf32> to vector<8x32xf32>
    %9 = tpu.concatenate %4, %5, %6, %7, %8 in 1 : vector<8x32xf32>, vector<8x32xf32>, vector<8x32xf32>, vector<8x32xf32>, vector<8x32xf32> -> vector<8x160xf32>
    %10 = arith.truncf %9 : vector<8x160xf32> to vector<8x160xbf16>
    %c0_2 = arith.constant 0 : index
    %c0_3 = arith.constant 0 : index
    %11 = vector.load %arg2[%c0_2, %c0_3] : memref<160x256xbf16, #tpu.memory_space<vmem>>, vector<160x256xbf16>
    %cst_4 = arith.constant dense<0.000000e+00> : vector<8x256xf32>
    %12 = tpu.matmul %10, %11, %cst_4 {dimension_numbers = #tpu.dot_dimension_numbers<[1], [0], [0], [1], [0, 0, 1, 1], [], []>} : vector<8x160xbf16>, vector<160x256xbf16>, vector<8x256xf32> -> vector<8x256xf32>
    %c0_5 = arith.constant 0 : index
    %c0_6 = arith.constant 0 : index
    %13 = vector.load %arg3[%c0_5, %c0_6] : memref<1x256xf32, #tpu.memory_space<vmem>>, vector<1x256xf32>
    %14 = vector.broadcast %13 : vector<1x256xf32> to vector<8x256xf32>
    %15 = arith.mulf %12, %14 : vector<8x256xf32>
    %c0_7 = arith.constant 0 : index
    %c0_8 = arith.constant 0 : index
    %16 = vector.load %arg4[%c0_7, %c0_8] : memref<1x256xf32, #tpu.memory_space<vmem>>, vector<1x256xf32>
    %17 = vector.broadcast %16 : vector<1x256xf32> to vector<8x256xf32>
    %18 = arith.addf %15, %17 : vector<8x256xf32>
    %cst_9 = arith.constant 0.000000e+00 : f32
    %19 = vector.broadcast %cst_9 : f32 to vector<8x256xf32>
    %20 = arith.maximumf %18, %19 : vector<8x256xf32>
    %cst_10 = arith.constant 0.000000e+00 : f32
    %21 = vector.broadcast %cst_10 : f32 to vector<2x256xf32>
    %22 = tpu.concatenate %21, %20, %21 in 0 : vector<2x256xf32>, vector<8x256xf32>, vector<2x256xf32> -> vector<12x256xf32>
    %23 = vector.extract_strided_slice %22 {offsets = [0, 0], sizes = [8, 256], strides = [1, 1]} : vector<12x256xf32> to vector<8x256xf32>
    %24 = vector.extract_strided_slice %22 {offsets = [1, 0], sizes = [8, 256], strides = [1, 1]} : vector<12x256xf32> to vector<8x256xf32>
    %25 = vector.extract_strided_slice %22 {offsets = [2, 0], sizes = [8, 256], strides = [1, 1]} : vector<12x256xf32> to vector<8x256xf32>
    %26 = vector.extract_strided_slice %22 {offsets = [3, 0], sizes = [8, 256], strides = [1, 1]} : vector<12x256xf32> to vector<8x256xf32>
    %27 = vector.extract_strided_slice %22 {offsets = [4, 0], sizes = [8, 256], strides = [1, 1]} : vector<12x256xf32> to vector<8x256xf32>
    %28 = tpu.concatenate %23, %24, %25, %26, %27 in 1 : vector<8x256xf32>, vector<8x256xf32>, vector<8x256xf32>, vector<8x256xf32>, vector<8x256xf32> -> vector<8x1280xf32>
    %29 = arith.truncf %28 : vector<8x1280xf32> to vector<8x1280xbf16>
    %c0_11 = arith.constant 0 : index
    %c0_12 = arith.constant 0 : index
    %30 = vector.load %arg5[%c0_11, %c0_12] : memref<1280x256xbf16, #tpu.memory_space<vmem>>, vector<1280x256xbf16>
    %cst_13 = arith.constant dense<0.000000e+00> : vector<8x256xf32>
    %31 = tpu.matmul %29, %30, %cst_13 {dimension_numbers = #tpu.dot_dimension_numbers<[1], [0], [0], [1], [0, 0, 1, 1], [], []>} : vector<8x1280xbf16>, vector<1280x256xbf16>, vector<8x256xf32> -> vector<8x256xf32>
    %c0_14 = arith.constant 0 : index
    %c0_15 = arith.constant 0 : index
    %32 = vector.load %arg6[%c0_14, %c0_15] : memref<1x256xf32, #tpu.memory_space<vmem>>, vector<1x256xf32>
    %33 = vector.broadcast %32 : vector<1x256xf32> to vector<8x256xf32>
    %34 = arith.mulf %31, %33 : vector<8x256xf32>
    %c0_16 = arith.constant 0 : index
    %c0_17 = arith.constant 0 : index
    %35 = vector.load %arg7[%c0_16, %c0_17] : memref<1x256xf32, #tpu.memory_space<vmem>>, vector<1x256xf32>
    %36 = vector.broadcast %35 : vector<1x256xf32> to vector<8x256xf32>
    %37 = arith.addf %34, %36 : vector<8x256xf32>
    %cst_18 = arith.constant 0.000000e+00 : f32
    %38 = vector.broadcast %cst_18 : f32 to vector<8x256xf32>
    %39 = arith.maximumf %37, %38 : vector<8x256xf32>
    %cst_19 = arith.constant 0.000000e+00 : f32
    %40 = vector.broadcast %cst_19 : f32 to vector<2x256xf32>
    %41 = tpu.concatenate %40, %39, %40 in 0 : vector<2x256xf32>, vector<8x256xf32>, vector<2x256xf32> -> vector<12x256xf32>
    %42 = vector.extract_strided_slice %41 {offsets = [0, 0], sizes = [8, 256], strides = [1, 1]} : vector<12x256xf32> to vector<8x256xf32>
    %43 = vector.extract_strided_slice %41 {offsets = [1, 0], sizes = [8, 256], strides = [1, 1]} : vector<12x256xf32> to vector<8x256xf32>
    %44 = vector.extract_strided_slice %41 {offsets = [2, 0], sizes = [8, 256], strides = [1, 1]} : vector<12x256xf32> to vector<8x256xf32>
    %45 = vector.extract_strided_slice %41 {offsets = [3, 0], sizes = [8, 256], strides = [1, 1]} : vector<12x256xf32> to vector<8x256xf32>
    %46 = vector.extract_strided_slice %41 {offsets = [4, 0], sizes = [8, 256], strides = [1, 1]} : vector<12x256xf32> to vector<8x256xf32>
    %47 = tpu.concatenate %42, %43, %44, %45, %46 in 1 : vector<8x256xf32>, vector<8x256xf32>, vector<8x256xf32>, vector<8x256xf32>, vector<8x256xf32> -> vector<8x1280xf32>
    %48 = arith.truncf %47 : vector<8x1280xf32> to vector<8x1280xbf16>
    %c0_20 = arith.constant 0 : index
    %c0_21 = arith.constant 0 : index
    %49 = vector.load %arg8[%c0_20, %c0_21] : memref<1280x32xbf16, #tpu.memory_space<vmem>>, vector<1280x32xbf16>
    %cst_22 = arith.constant dense<0.000000e+00> : vector<8x32xf32>
    %50 = tpu.matmul %48, %49, %cst_22 {dimension_numbers = #tpu.dot_dimension_numbers<[1], [0], [0], [1], [0, 0, 1, 1], [], []>} : vector<8x1280xbf16>, vector<1280x32xbf16>, vector<8x32xf32> -> vector<8x32xf32>
    %c0_23 = arith.constant 0 : index
    %c0_24 = arith.constant 0 : index
    %51 = vector.load %arg9[%c0_23, %c0_24] : memref<1x32xf32, #tpu.memory_space<vmem>>, vector<1x32xf32>
    %52 = vector.broadcast %51 : vector<1x32xf32> to vector<8x32xf32>
    %53 = arith.mulf %50, %52 : vector<8x32xf32>
    %c0_25 = arith.constant 0 : index
    %c0_26 = arith.constant 0 : index
    %54 = vector.load %arg10[%c0_25, %c0_26] : memref<1x32xf32, #tpu.memory_space<vmem>>, vector<1x32xf32>
    %55 = vector.broadcast %54 : vector<1x32xf32> to vector<8x32xf32>
    %56 = arith.addf %53, %55 : vector<8x32xf32>
    %cst_27 = arith.constant 0.000000e+00 : f32
    %57 = vector.broadcast %cst_27 : f32 to vector<8x32xf32>
    %58 = arith.maximumf %56, %57 : vector<8x32xf32>
    %59 = arith.truncf %58 : vector<8x32xf32> to vector<8x32xbf16>
    %c0_28 = arith.constant 0 : index
    %c0_29 = arith.constant 0 : index
    %60 = vector.load %arg11[%c0_28, %c0_29] : memref<32x128xbf16, #tpu.memory_space<vmem>>, vector<32x128xbf16>
    %cst_30 = arith.constant dense<0.000000e+00> : vector<8x128xf32>
    %61 = tpu.matmul %59, %60, %cst_30 {dimension_numbers = #tpu.dot_dimension_numbers<[1], [0], [0], [1], [0, 0, 1, 1], [], []>} : vector<8x32xbf16>, vector<32x128xbf16>, vector<8x128xf32> -> vector<8x128xf32>
    %c0_31 = arith.constant 0 : index
    %c0_32 = arith.constant 0 : index
    %62 = vector.load %arg12[%c0_31, %c0_32] : memref<1x128xf32, #tpu.memory_space<vmem>>, vector<1x128xf32>
    %63 = vector.broadcast %62 : vector<1x128xf32> to vector<8x128xf32>
    %64 = arith.addf %61, %63 : vector<8x128xf32>
    %c0_33 = arith.constant 0 : index
    %c0_34 = arith.constant 0 : index
    %c0_35 = arith.constant 0 : index
    %65 = vector.load %arg13[%c0_33, %c0_34, %c0_35] : memref<1x8x128xf32, #tpu.memory_space<vmem>>, vector<1x8x128xf32>
    %66 = vector.shape_cast %65 : vector<1x8x128xf32> to vector<8x128xf32>
    %67 = vector.shape_cast %64 : vector<8x128xf32> to vector<1x8x128xf32>
    tpu.vector_store %arg13[%c0_33, %c0_34, %c0_35], %67 {strides = array<i32>} : memref<1x8x128xf32, #tpu.memory_space<vmem>>, vector<1x8x128xf32>,
    return
  }
  func.func @transform_0(%arg0: i32) -> (i32, i32, i32) {
    %c0_i32 = arith.constant 0 : i32
    %c0_i32_0 = arith.constant 0 : i32
    %c0_i32_1 = arith.constant 0 : i32
    return %arg0, %c0_i32, %c0_i32_0 : i32, i32, i32
  }
  func.func @transform_1(%arg0: i32) -> (i32, i32) {
    %c0_i32 = arith.constant 0 : i32
    %c0_i32_0 = arith.constant 0 : i32
    %c0_i32_1 = arith.constant 0 : i32
    return %c0_i32, %c0_i32_0 : i32, i32
  }
  func.func @transform_2(%arg0: i32) -> (i32, i32) {
    %c0_i32 = arith.constant 0 : i32
    %c0_i32_0 = arith.constant 0 : i32
    %c0_i32_1 = arith.constant 0 : i32
    return %c0_i32, %c0_i32_0 : i32, i32
  }
  func.func @transform_3(%arg0: i32) -> (i32, i32) {
    %c0_i32 = arith.constant 0 : i32
    %c0_i32_0 = arith.constant 0 : i32
    %c0_i32_1 = arith.constant 0 : i32
    return %c0_i32, %c0_i32_0 : i32, i32
  }
  func.func @transform_4(%arg0: i32) -> (i32, i32) {
    %c0_i32 = arith.constant 0 : i32
    %c0_i32_0 = arith.constant 0 : i32
    %c0_i32_1 = arith.constant 0 : i32
    return %c0_i32, %c0_i32_0 : i32, i32
  }
  func.func @transform_5(%arg0: i32) -> (i32, i32) {
    %c0_i32 = arith.constant 0 : i32
    %c0_i32_0 = arith.constant 0 : i32
    %c0_i32_1 = arith.constant 0 : i32
    return %c0_i32, %c0_i32_0 : i32, i32
  }
  func.func @transform_6(%arg0: i32) -> (i32, i32) {
    %c0_i32 = arith.constant 0 : i32
    %c0_i32_0 = arith.constant 0 : i32
    %c0_i32_1 = arith.constant 0 : i32
    return %c0_i32, %c0_i32_0 : i32, i32
  }
  func.func @transform_7(%arg0: i32) -> (i32, i32) {
    %c0_i32 = arith.constant 0 : i32
    %c0_i32_0 = arith.constant 0 : i32
    %c0_i32_1 = arith.constant 0 : i32
    return %c0_i32, %c0_i32_0 : i32, i32
  }
  func.func @transform_8(%arg0: i32) -> (i32, i32) {
    %c0_i32 = arith.constant 0 : i32
    %c0_i32_0 = arith.constant 0 : i32
    %c0_i32_1 = arith.constant 0 : i32
    return %c0_i32, %c0_i32_0 : i32, i32
  }
  func.func @transform_9(%arg0: i32) -> (i32, i32) {
    %c0_i32 = arith.constant 0 : i32
    %c0_i32_0 = arith.constant 0 : i32
    %c0_i32_1 = arith.constant 0 : i32
    return %c0_i32, %c0_i32_0 : i32, i32
  }
  func.func @transform_10(%arg0: i32) -> (i32, i32) {
    %c0_i32 = arith.constant 0 : i32
    %c0_i32_0 = arith.constant 0 : i32
    %c0_i32_1 = arith.constant 0 : i32
    return %c0_i32, %c0_i32_0 : i32, i32
  }
  func.func @transform_11(%arg0: i32) -> (i32, i32) {
    %c0_i32 = arith.constant 0 : i32
    %c0_i32_0 = arith.constant 0 : i32
    %c0_i32_1 = arith.constant 0 : i32
    return %c0_i32, %c0_i32_0 : i32, i32
  }
  func.func @transform_12(%arg0: i32) -> (i32, i32, i32) {
    %c0_i32 = arith.constant 0 : i32
    %c0_i32_0 = arith.constant 0 : i32
    %c0_i32_1 = arith.constant 0 : i32
    return %arg0, %c0_i32, %c0_i32_0 : i32, i32, i32
  }
}

</mosaic_0001>

<llo_original>
// kernel: tpu_custom_call.1
$region0: #{tpu_custom_call.1}
  #allocation0 [shape = 'u32[]', space=smem, size = 0x4, offset = 0x4, fixed_abs, tag = 'smem constant byte address 0x4 - core index']
  #allocation1 [shape = 'u32[144,128]{1,0:T(1,128)}', space=vmem, size = 0x12000, scoped, tag = 'internal scratch']
  %s0 = inlined_call_operand.vmem [shape: f32[2,8,32], index: 0, kind: input, shape index: {}]
  %s1 = inlined_call_operand.vmem [shape: bf16[160,256], index: 1, kind: input, shape index: {}]
  %s2 = inlined_call_operand.vmem [shape: f32[1,256], index: 2, kind: input, shape index: {}]
  %s3 = inlined_call_operand.vmem [shape: f32[1,256], index: 3, kind: input, shape index: {}]
  %s4 = inlined_call_operand.hbm [shape: bf16[1280,256], index: 4, kind: input, shape index: {}]
  %s5 = inlined_call_operand.vmem [shape: f32[1,256], index: 5, kind: input, shape index: {}]
  %s6 = inlined_call_operand.vmem [shape: f32[1,256], index: 6, kind: input, shape index: {}]
  %s7 = inlined_call_operand.vmem [shape: bf16[1280,32], index: 7, kind: input, shape index: {}]
  %s8 = inlined_call_operand.vmem [shape: f32[1,32], index: 8, kind: input, shape index: {}]
  %s9 = inlined_call_operand.vmem [shape: f32[1,32], index: 9, kind: input, shape index: {}]
  %s10 = inlined_call_operand.vmem [shape: bf16[32,128], index: 10, kind: input, shape index: {}]
  %s11 = inlined_call_operand.vmem [shape: f32[1,128], index: 11, kind: input, shape index: {}]
  %s12 = inlined_call_operand.hbm [shape: f32[2,8,128], index: 12, kind: output, shape index: {}]
  %s13 = sld [smem:[#allocation0]]
  $region85: #{tpu_custom_call.1} parent=0
    _
  %s15 = ssub.s32 1, %s13
  %s16 = scalar_select 0, %s15, %s13
  $region1: #{tpu_custom_call.1} parent=0
    #allocation2 [shape = 'u8[655360]{0}', space=vmem, size = 0xa0000, scoped, tag = 'input window, operand 4, single buffered']
    #allocation3 [shape = 's32[2]{0}', space=sflag, size = 0x8, scoped, tag = 'scoped memory for tpu_custom_call.1']
    #allocation4 [shape = 's32[2]{0}', space=sflag, size = 0x8, scoped, tag = 'scoped memory for tpu_custom_call.1']
    #allocation5 [shape = 'u8[8192]{0}', space=vmem, size = 0x2000, scoped, tag = 'output window, operand 0']
    %17 = vsyncpa [#allocation3], 0
    %18 = vsyncpa [#allocation4], 0
    %s19 = scalar_lea.sflag [#allocation4], 1
    %20 = vsyncpa %s19, 0
    loop: start=0, step=1, limit=4
    $region2: #{tpu_custom_call.1} parent=1 // loop_pre_header
      _
    $region3: #{tpu_custom_call.1} parent=1 // loop_header
      %s22 = sphi 0, %s26
      %p23 = scmp.ge.s32.totalorder %s22, 4
      %s32 = sphi 0, %s34
      %s35 = sphi 0, %s32
      %s36 = sphi 0, %s35
      %s52 = sphi 0, %s36
      %s56 = sphi 0, %s56
      %s58 = sphi 0, %s56
      %s59 = sphi 0, %s58
      %s73 = sphi 0, %s59
      %s77 = sphi 0, %s77
      %s79 = sphi 0, %s77
      %s80 = sphi 0, %s79
      %s94 = sphi 0, %s80
      %s98 = sphi 0, %s98
      %s100 = sphi 0, %s98
      %s101 = sphi 0, %s100
      %s115 = sphi 0, %s101
      %s119 = sphi 0, %s119
      %s121 = sphi 0, %s119
      %s122 = sphi 0, %s121
      %s136 = sphi 0, %s122
      %s140 = sphi 0, %s140
      %s142 = sphi 0, %s140
      %s143 = sphi 0, %s142
      %s157 = sphi 0, %s143
      %s161 = sphi 0, %s161
      %s163 = sphi 0, %s161
      %s164 = sphi 0, %s163
      %s178 = sphi 0, %s164
      %s182 = sphi 0, %s182
      %s184 = sphi 0, %s182
      %s185 = sphi 0, %s184
      %s199 = sphi 0, %s185
      %s203 = sphi 0, %s203
      %s205 = sphi 0, %s203
      %s206 = sphi 0, %s205
      %s220 = sphi 0, %s206
      %s224 = sphi 0, %s224
      %s226 = sphi 0, %s224
      %s227 = sphi 0, %s226
      %s241 = sphi 0, %s227
      %s245 = sphi 0, %s245
      %s247 = sphi 0, %s245
      %s248 = sphi 0, %s247
      %s262 = sphi 0, %s248
      %s266 = sphi 0, %s266
      %s268 = sphi 0, %s266
      %s269 = sphi 0, %s268
      %s283 = sphi 0, %s269
      %s289 = sphi 0, %s291
      %s292 = sphi 0, %s289
      %s293 = sphi 0, %s292
      %s309 = sphi 0, %s293
    $region4: #{tpu_custom_call.1} parent=1 // loop_header_branch
      %25 = sbr.rel (%p23) target = $region8
    $region5: #{tpu_custom_call.1} parent=1 // loop_body
      %s27 = ssub.s32 %s22, 1
      %s28 = ssub.s32 %s22, 2
      %s29 = sadd.s32 %s22, 1
      %s30 = ssub.s32 %s22, %s29
      %p31 = scmp.eq.s32.totalorder %s30, 0
      %s33 = sadd.s32 %s32, 1
      %s34 = scalar_select %p31, %s32, %s33
      %p37 = pneg %p31
      %p38 = scmp.eq.s32.totalorder %s22, 1
      %p39 = por %p37, %p38
      %p40 = scmp.ne.s32.totalorder %s32, %s35
      %p41 = scmp.eq.s32.totalorder %s22, 0
      %p42 = por %p40, %p41
      %p43 = scmp.ne.s32.totalorder %s32, %s35
      %p44 = scmp.eq.s32.totalorder %s27, 1
      %p45 = por %p43, %p44
      %p46 = scmp.ne.s32.totalorder %s35, %s36
      %p47 = scmp.eq.s32.totalorder %s27, 0
      %p48 = por %p46, %p47
      %p49 = scmp.ne.s32.totalorder %s35, %s36
      %p50 = scmp.eq.s32.totalorder %s28, 1
      %p51 = por %p49, %p50
      %p53 = scmp.ne.s32.totalorder %s36, %s52
      %p54 = scmp.eq.s32.totalorder %s28, 0
      %p55 = por %p53, %p54
      %s57 = sadd.s32 %s56, 1
      %p60 = scmp.eq.s32.totalorder %s22, 1
      %p61 = scmp.ne.s32.totalorder %s56, %s58
      %p62 = scmp.eq.s32.totalorder %s22, 0
      %p63 = por %p61, %p62
      %p64 = scmp.ne.s32.totalorder %s56, %s58
      %p65 = scmp.eq.s32.totalorder %s27, 1
      %p66 = por %p64, %p65
      %p67 = scmp.ne.s32.totalorder %s58, %s59
      %p68 = scmp.eq.s32.totalorder %s27, 0
      %p69 = por %p67, %p68
      %p70 = scmp.ne.s32.totalorder %s58, %s59
      %p71 = scmp.eq.s32.totalorder %s28, 1
      %p72 = por %p70, %p71
      %p74 = scmp.ne.s32.totalorder %s59, %s73
      %p75 = scmp.eq.s32.totalorder %s28, 0
      %p76 = por %p74, %p75
      %s78 = sadd.s32 %s77, 1
      %p81 = scmp.eq.s32.totalorder %s22, 1
      %p82 = scmp.ne.s32.totalorder %s77, %s79
      %p83 = scmp.eq.s32.totalorder %s22, 0
      %p84 = por %p82, %p83
      %p85 = scmp.ne.s32.totalorder %s77, %s79
      %p86 = scmp.eq.s32.totalorder %s27, 1
      %p87 = por %p85, %p86
      %p88 = scmp.ne.s32.totalorder %s79, %s80
      %p89 = scmp.eq.s32.totalorder %s27, 0
      %p90 = por %p88, %p89
      %p91 = scmp.ne.s32.totalorder %s79, %s80
      %p92 = scmp.eq.s32.totalorder %s28, 1
      %p93 = por %p91, %p92
      %p95 = scmp.ne.s32.totalorder %s80, %s94
      %p96 = scmp.eq.s32.totalorder %s28, 0
      %p97 = por %p95, %p96
      %s99 = sadd.s32 %s98, 1
      %p102 = scmp.eq.s32.totalorder %s22, 1
      %p103 = scmp.ne.s32.totalorder %s98, %s100
      %p104 = scmp.eq.s32.totalorder %s22, 0
      %p105 = por %p103, %p104
      %p106 = scmp.ne.s32.totalorder %s98, %s100
      %p107 = scmp.eq.s32.totalorder %s27, 1
      %p108 = por %p106, %p107
      %p109 = scmp.ne.s32.totalorder %s100, %s101
      %p110 = scmp.eq.s32.totalorder %s27, 0
      %p111 = por %p109, %p110
      %p112 = scmp.ne.s32.totalorder %s100, %s101
      %p113 = scmp.eq.s32.totalorder %s28, 1
      %p114 = por %p112, %p113
      %p116 = scmp.ne.s32.totalorder %s101, %s115
      %p117 = scmp.eq.s32.totalorder %s28, 0
      %p118 = por %p116, %p117
      %s120 = sadd.s32 %s119, 1
      %p123 = scmp.eq.s32.totalorder %s22, 1
      %p124 = scmp.ne.s32.totalorder %s119, %s121
      %p125 = scmp.eq.s32.totalorder %s22, 0
      %p126 = por %p124, %p125
      %p127 = scmp.ne.s32.totalorder %s119, %s121
      %p128 = scmp.eq.s32.totalorder %s27, 1
      %p129 = por %p127, %p128
      %p130 = scmp.ne.s32.totalorder %s121, %s122
      %p131 = scmp.eq.s32.totalorder %s27, 0
      %p132 = por %p130, %p131
      %p133 = scmp.ne.s32.totalorder %s121, %s122
      %p134 = scmp.eq.s32.totalorder %s28, 1
      %p135 = por %p133, %p134
      %p137 = scmp.ne.s32.totalorder %s122, %s136
      %p138 = scmp.eq.s32.totalorder %s28, 0
      %p139 = por %p137, %p138
      %s141 = sadd.s32 %s140, 1
      %p144 = scmp.eq.s32.totalorder %s22, 1
      %p145 = scmp.ne.s32.totalorder %s140, %s142
      %p146 = scmp.eq.s32.totalorder %s22, 0
      %p147 = por %p145, %p146
      %p148 = scmp.ne.s32.totalorder %s140, %s142
      %p149 = scmp.eq.s32.totalorder %s27, 1
      %p150 = por %p148, %p149
      %p151 = scmp.ne.s32.totalorder %s142, %s143
      %p152 = scmp.eq.s32.totalorder %s27, 0
      %p153 = por %p151, %p152
      %p154 = scmp.ne.s32.totalorder %s142, %s143
      %p155 = scmp.eq.s32.totalorder %s28, 1
      %p156 = por %p154, %p155
      %p158 = scmp.ne.s32.totalorder %s143, %s157
      %p159 = scmp.eq.s32.totalorder %s28, 0
      %p160 = por %p158, %p159
      %s162 = sadd.s32 %s161, 1
      %p165 = scmp.eq.s32.totalorder %s22, 1
      %p166 = scmp.ne.s32.totalorder %s161, %s163
      %p167 = scmp.eq.s32.totalorder %s22, 0
      %p168 = por %p166, %p167
      %p169 = scmp.ne.s32.totalorder %s161, %s163
      %p170 = scmp.eq.s32.totalorder %s27, 1
      %p171 = por %p169, %p170
      %p172 = scmp.ne.s32.totalorder %s163, %s164
      %p173 = scmp.eq.s32.totalorder %s27, 0
      %p174 = por %p172, %p173
      %p175 = scmp.ne.s32.totalorder %s163, %s164
      %p176 = scmp.eq.s32.totalorder %s28, 1
      %p177 = por %p175, %p176
      %p179 = scmp.ne.s32.totalorder %s164, %s178
      %p180 = scmp.eq.s32.totalorder %s28, 0
      %p181 = por %p179, %p180
      %s183 = sadd.s32 %s182, 1
      %p186 = scmp.eq.s32.totalorder %s22, 1
      %p187 = scmp.ne.s32.totalorder %s182, %s184
      %p188 = scmp.eq.s32.totalorder %s22, 0
      %p189 = por %p187, %p188
      %p190 = scmp.ne.s32.totalorder %s182, %s184
      %p191 = scmp.eq.s32.totalorder %s27, 1
      %p192 = por %p190, %p191
      %p193 = scmp.ne.s32.totalorder %s184, %s185
      %p194 = scmp.eq.s32.totalorder %s27, 0
      %p195 = por %p193, %p194
      %p196 = scmp.ne.s32.totalorder %s184, %s185
      %p197 = scmp.eq.s32.totalorder %s28, 1
      %p198 = por %p196, %p197
      %p200 = scmp.ne.s32.totalorder %s185, %s199
      %p201 = scmp.eq.s32.totalorder %s28, 0
      %p202 = por %p200, %p201
      %s204 = sadd.s32 %s203, 1
      %p207 = scmp.eq.s32.totalorder %s22, 1
      %p208 = scmp.ne.s32.totalorder %s203, %s205
      %p209 = scmp.eq.s32.totalorder %s22, 0
      %p210 = por %p208, %p209
      %p211 = scmp.ne.s32.totalorder %s203, %s205
      %p212 = scmp.eq.s32.totalorder %s27, 1
      %p213 = por %p211, %p212
      %p214 = scmp.ne.s32.totalorder %s205, %s206
      %p215 = scmp.eq.s32.totalorder %s27, 0
      %p216 = por %p214, %p215
      %p217 = scmp.ne.s32.totalorder %s205, %s206
      %p218 = scmp.eq.s32.totalorder %s28, 1
      %p219 = por %p217, %p218
      %p221 = scmp.ne.s32.totalorder %s206, %s220
      %p222 = scmp.eq.s32.totalorder %s28, 0
      %p223 = por %p221, %p222
      %s225 = sadd.s32 %s224, 1
      %p228 = scmp.eq.s32.totalorder %s22, 1
      %p229 = scmp.ne.s32.totalorder %s224, %s226
      %p230 = scmp.eq.s32.totalorder %s22, 0
      %p231 = por %p229, %p230
      %p232 = scmp.ne.s32.totalorder %s224, %s226
      %p233 = scmp.eq.s32.totalorder %s27, 1
      %p234 = por %p232, %p233
      %p235 = scmp.ne.s32.totalorder %s226, %s227
      %p236 = scmp.eq.s32.totalorder %s27, 0
      %p237 = por %p235, %p236
      %p238 = scmp.ne.s32.totalorder %s226, %s227
      %p239 = scmp.eq.s32.totalorder %s28, 1
      %p240 = por %p238, %p239
      %p242 = scmp.ne.s32.totalorder %s227, %s241
      %p243 = scmp.eq.s32.totalorder %s28, 0
      %p244 = por %p242, %p243
      %s246 = sadd.s32 %s245, 1
      %p249 = scmp.eq.s32.totalorder %s22, 1
      %p250 = scmp.ne.s32.totalorder %s245, %s247
      %p251 = scmp.eq.s32.totalorder %s22, 0
      %p252 = por %p250, %p251
      %p253 = scmp.ne.s32.totalorder %s245, %s247
      %p254 = scmp.eq.s32.totalorder %s27, 1
      %p255 = por %p253, %p254
      %p256 = scmp.ne.s32.totalorder %s247, %s248
      %p257 = scmp.eq.s32.totalorder %s27, 0
      %p258 = por %p256, %p257
      %p259 = scmp.ne.s32.totalorder %s247, %s248
      %p260 = scmp.eq.s32.totalorder %s28, 1
      %p261 = por %p259, %p260
      %p263 = scmp.ne.s32.totalorder %s248, %s262
      %p264 = scmp.eq.s32.totalorder %s28, 0
      %p265 = por %p263, %p264
      %s267 = sadd.s32 %s266, 1
      %p270 = scmp.eq.s32.totalorder %s22, 1
      %p271 = scmp.ne.s32.totalorder %s266, %s268
      %p272 = scmp.eq.s32.totalorder %s22, 0
      %p273 = por %p271, %p272
      %p274 = scmp.ne.s32.totalorder %s266, %s268
      %p275 = scmp.eq.s32.totalorder %s27, 1
      %p276 = por %p274, %p275
      %p277 = scmp.ne.s32.totalorder %s268, %s269
      %p278 = scmp.eq.s32.totalorder %s27, 0
      %p279 = por %p277, %p278
      %p280 = scmp.ne.s32.totalorder %s268, %s269
      %p281 = scmp.eq.s32.totalorder %s28, 1
      %p282 = por %p280, %p281
      %p284 = scmp.ne.s32.totalorder %s269, %s283
      %p285 = scmp.eq.s32.totalorder %s28, 0
      %p286 = por %p284, %p285
      %s287 = ssub.s32 %s22, %s29
      %p288 = scmp.eq.s32.totalorder %s287, 0
      %s290 = sadd.s32 %s289, 1
      %s291 = scalar_select %p288, %s289, %s290
      %p294 = pneg %p288
      %p295 = scmp.eq.s32.totalorder %s22, 1
      %p296 = por %p294, %p295
      %p297 = scmp.ne.s32.totalorder %s289, %s292
      %p298 = scmp.eq.s32.totalorder %s22, 0
      %p299 = por %p297, %p298
      %p300 = scmp.ne.s32.totalorder %s289, %s292
      %p301 = scmp.eq.s32.totalorder %s27, 1
      %p302 = por %p300, %p301
      %p303 = scmp.ne.s32.totalorder %s292, %s293
      %p304 = scmp.eq.s32.totalorder %s27, 0
      %p305 = por %p303, %p304
      %p306 = scmp.ne.s32.totalorder %s292, %s293
      %p307 = scmp.eq.s32.totalorder %s28, 1
      %p308 = por %p306, %p307
      %p310 = scmp.ne.s32.totalorder %s293, %s309
      %p311 = scmp.eq.s32.totalorder %s28, 0
      %p312 = por %p310, %p311
      %p313 = scmp.le.s32.totalorder 1, %s22
      %p314 = scmp.lt.s32.totalorder %s22, 3
      %p315 = pnand %p313, %p314
      %p316 = pneg %p315
      // Predicated region
      $region9: #{tpu_custom_call.1} parent=5 // pred_check
        _
      $region10: #{tpu_custom_call.1} parent=5 // pred_check_branch
        %318 = sbr.rel (%p315) target = $region12
      $region11: #{tpu_custom_call.1} parent=5 // pred_region
        %s319 = ssub.s32 %s22, 1
        // Predicated region
        $region13: #{tpu_custom_call.1} parent=11 // pred_check
          %p320 = pneg %p69
        $region14: #{tpu_custom_call.1} parent=11 // pred_check_branch
          %322 = sbr.rel (%p320) target = $region16
        $region15: #{tpu_custom_call.1} parent=11 // pred_region
          _
        $region16: #{tpu_custom_call.1} parent=11 // pred_fallthru
          _
        // Predicated region
        $region17: #{tpu_custom_call.1} parent=11 // pred_check
          %p323 = pneg %p90
        $region18: #{tpu_custom_call.1} parent=11 // pred_check_branch
          %325 = sbr.rel (%p323) target = $region20
        $region19: #{tpu_custom_call.1} parent=11 // pred_region
          _
        $region20: #{tpu_custom_call.1} parent=11 // pred_fallthru
          _
        // Predicated region
        $region21: #{tpu_custom_call.1} parent=11 // pred_check
          %p326 = pneg %p111
        $region22: #{tpu_custom_call.1} parent=11 // pred_check_branch
          %328 = sbr.rel (%p326) target = $region24
        $region23: #{tpu_custom_call.1} parent=11 // pred_region
          _
        $region24: #{tpu_custom_call.1} parent=11 // pred_fallthru
          _
        // Predicated region
        $region25: #{tpu_custom_call.1} parent=11 // pred_check
          %p329 = pneg %p132
        $region26: #{tpu_custom_call.1} parent=11 // pred_check_branch
          %331 = sbr.rel (%p329) target = $region28
        $region27: #{tpu_custom_call.1} parent=11 // pred_region
          %s333 = ssub.s32 20480, 20480
          %334 = vsyncadd [#allocation3], %s333
          %s335 = sshll.u32 [#allocation2], 4
          %s336 = int_to_ptr.vmem [resolvable:$true] %s335
          %341 = dma.hbm_to_vmem [thread:$0]  %s4, 20480, %s336, [#allocation3], 128, 128, 8
        $region28: #{tpu_custom_call.1} parent=11 // pred_fallthru
          _
        // Predicated region
        $region29: #{tpu_custom_call.1} parent=11 // pred_check
          %p342 = pneg %p153
        $region30: #{tpu_custom_call.1} parent=11 // pred_check_branch
          %344 = sbr.rel (%p342) target = $region32
        $region31: #{tpu_custom_call.1} parent=11 // pred_region
          _
        $region32: #{tpu_custom_call.1} parent=11 // pred_fallthru
          _
        // Predicated region
        $region33: #{tpu_custom_call.1} parent=11 // pred_check
          %p345 = pneg %p174
        $region34: #{tpu_custom_call.1} parent=11 // pred_check_branch
          %347 = sbr.rel (%p345) target = $region36
        $region35: #{tpu_custom_call.1} parent=11 // pred_region
          _
        $region36: #{tpu_custom_call.1} parent=11 // pred_fallthru
          _
        // Predicated region
        $region37: #{tpu_custom_call.1} parent=11 // pred_check
          %p348 = pneg %p195
        $region38: #{tpu_custom_call.1} parent=11 // pred_check_branch
          %350 = sbr.rel (%p348) target = $region40
        $region39: #{tpu_custom_call.1} parent=11 // pred_region
          _
        $region40: #{tpu_custom_call.1} parent=11 // pred_fallthru
          _
        // Predicated region
        $region41: #{tpu_custom_call.1} parent=11 // pred_check
          %p351 = pneg %p216
        $region42: #{tpu_custom_call.1} parent=11 // pred_check_branch
          %353 = sbr.rel (%p351) target = $region44
        $region43: #{tpu_custom_call.1} parent=11 // pred_region
          _
        $region44: #{tpu_custom_call.1} parent=11 // pred_fallthru
          _
        // Predicated region
        $region45: #{tpu_custom_call.1} parent=11 // pred_check
          %p354 = pneg %p237
        $region46: #{tpu_custom_call.1} parent=11 // pred_check_branch
          %356 = sbr.rel (%p354) target = $region48
        $region47: #{tpu_custom_call.1} parent=11 // pred_region
          _
        $region48: #{tpu_custom_call.1} parent=11 // pred_fallthru
          _
        // Predicated region
        $region49: #{tpu_custom_call.1} parent=11 // pred_check
          %p357 = pneg %p258
        $region50: #{tpu_custom_call.1} parent=11 // pred_check_branch
          %359 = sbr.rel (%p357) target = $region52
        $region51: #{tpu_custom_call.1} parent=11 // pred_region
          _
        $region52: #{tpu_custom_call.1} parent=11 // pred_fallthru
          _
        // Predicated region
        $region53: #{tpu_custom_call.1} parent=11 // pred_check
          %p360 = pneg %p279
        $region54: #{tpu_custom_call.1} parent=11 // pred_check_branch
          %362 = sbr.rel (%p360) target = $region56
        $region55: #{tpu_custom_call.1} parent=11 // pred_region
          _
        $region56: #{tpu_custom_call.1} parent=11 // pred_fallthru
          _
      $region12: #{tpu_custom_call.1} parent=5 // pred_fallthru
        _
      %p363 = scmp.lt.s32.totalorder %s22, 2
      // Predicated region
      $region57: #{tpu_custom_call.1} parent=5 // pred_check
        %p364 = pneg %p363
      $region58: #{tpu_custom_call.1} parent=5 // pred_check_branch
        %366 = sbr.rel (%p364) target = $region60
      $region59: #{tpu_custom_call.1} parent=5 // pred_region
        // Predicated region
        $region61: #{tpu_custom_call.1} parent=59 // pred_check
          %p367 = pneg %p42
        $region62: #{tpu_custom_call.1} parent=59 // pred_check_branch
          %369 = sbr.rel (%p367) target = $region64
        $region63: #{tpu_custom_call.1} parent=59 // pred_region
          %p370 = scmp.lt.s32.totalorder %s22, 1
          %s371 = scalar_select %p370, %s22, 1
          %s372 = smul.addr %s371, 8
          %s373 = scalar_lea.vmem %s0, %s372
        $region64: #{tpu_custom_call.1} parent=59 // pred_fallthru
          _
      $region60: #{tpu_custom_call.1} parent=5 // pred_fallthru
        _
      %p374 = scmp.le.s32.totalorder 1, %s22
      %p375 = scmp.lt.s32.totalorder %s22, 3
      %p376 = pnand %p374, %p375
      %p377 = pneg %p376
      // Predicated region
      $region65: #{tpu_custom_call.1} parent=5 // pred_check
        _
      $region66: #{tpu_custom_call.1} parent=5 // pred_check_branch
        %379 = sbr.rel (%p376) target = $region68
      $region67: #{tpu_custom_call.1} parent=5 // pred_region
        %s380 = ssub.s32 %s22, 1
        // Predicated region
        $region69: #{tpu_custom_call.1} parent=67 // pred_check
          %p381 = pneg %p132
        $region70: #{tpu_custom_call.1} parent=67 // pred_check_branch
          %383 = sbr.rel (%p381) target = $region72
        $region71: #{tpu_custom_call.1} parent=67 // pred_region
          %384 = dma.done [#allocation3], 20480
        $region72: #{tpu_custom_call.1} parent=67 // pred_fallthru
          _
        %p385 = scmp.lt.s32.totalorder %s27, 1
        %s386 = scalar_select %p385, %s27, 1
        %s387 = smul.addr %s386, 8
        %s388 = scalar_lea.vmem %s0, %s387
        %p389 = pneg %p48
        %p390 = pneg %p45
        %p391 = pneg %p69
        %p392 = pneg %p66
        %p393 = pneg %p90
        %p394 = pneg %p87
        %p395 = pneg %p111
        %p396 = pneg %p108
        %p397 = pneg %p132
        %p398 = pneg %p129
        %p399 = pneg %p153
        %p400 = pneg %p150
        %p401 = pneg %p174
        %p402 = pneg %p171
        %p403 = pneg %p195
        %p404 = pneg %p192
        %p405 = pneg %p216
        %p406 = pneg %p213
        %p407 = pneg %p237
        %p408 = pneg %p234
        %p409 = pneg %p258
        %p410 = pneg %p255
        %p411 = pneg %p279
        %p412 = pneg %p276
        %p413 = pneg %p305
        %p414 = pneg %p302
        %s415 = sand.u32 %s292, 1
        %s416 = scalar_lea.sflag [#allocation4], %s415
        %s417 = sand.u32 %s292, 1
        %s418 = smul.addr %s417, 8
        %s419 = scalar_lea.vmem [#allocation5], %s418
        %p420 = scmp.lt.s32.totalorder %s27, 1
        %s421 = scalar_select %p420, %s27, 1
        %s422 = smul.addr %s421, 8
        %s423 = scalar_lea.vmem %s0, %s422
        %v425 = vld [vmem:[%s423] sm:$0xff]
        %v427 = vrot.slane %v425, 6
        %vm429 = vcmask 1041408
        %v430 = vsel %vm429, 0.0, %v427
        %v431 = vsel %vm429, %v427, 0.0
        %vm434 = vcmask 1046528
        %v435 = vrot.slane %v430, 1
        %v436 = vrot.slane %v431, 1
        %v437 = vsel %vm434, %v435, %v436
        %438 = vrot.lane.b32.xlu0 %v437, 32
        %v439 = vpop.permute.xlu0 %438
        %vm441 = vcmask 1045504
        %v442 = vrot.slane %v430, 2
        %v443 = vrot.slane %v431, 2
        %v444 = vsel %vm441, %v442, %v443
        %445 = vrot.lane.b32.xlu0 %v444, 64
        %v446 = vpop.permute.xlu0 %445
        %vm448 = vcmask 1044480
        %v449 = vrot.slane %v430, 3
        %v450 = vrot.slane %v431, 3
        %v451 = vsel %vm448, %v449, %v450
        %452 = vrot.lane.b32.xlu0 %v451, 96
        %v453 = vpop.permute.xlu0 %452
        %vm455 = vcmask 1043456
        %v456 = vrot.slane %v430, 4
        %v457 = vrot.slane %v431, 4
        %v458 = vsel %vm455, %v456, %v457
        %vm460 = vcmask 261120
        %v461 = vsel %vm460, %v430, %v439
        %vm462 = vcmask 523264
        %v463 = vsel %vm462, %v461, %v446
        %vm464 = vcmask 785408
        %v465 = vsel %vm464, %v463, %v453
        %v466 = vpack.c.bf16 %v465, %v465
        %v467 = vpack.c.bf16 %v458, %v458
        %v468 = vld [vmem:[%s1] sm:$0xff]
        %v469 = vld [vmem:[%s1 + $0x8] sm:$0xff]
        %v470 = vld [vmem:[%s1 + $0x10] sm:$0xff]
        %v471 = vld [vmem:[%s1 + $0x18] sm:$0xff]
        %v472 = vld [vmem:[%s1 + $0x20] sm:$0xff]
        %v473 = vld [vmem:[%s1 + $0x28] sm:$0xff]
        %v474 = vld [vmem:[%s1 + $0x30] sm:$0xff]
        %v475 = vld [vmem:[%s1 + $0x38] sm:$0xff]
        %v476 = vld [vmem:[%s1 + $0x40] sm:$0xff]
        %v477 = vld [vmem:[%s1 + $0x48] sm:$0xff]
        %v478 = vld [vmem:[%s1 + $0x50] sm:$0xff]
        %v479 = vld [vmem:[%s1 + $0x58] sm:$0xff]
        %v480 = vld [vmem:[%s1 + $0x60] sm:$0xff]
        %v481 = vld [vmem:[%s1 + $0x68] sm:$0xff]
        %v482 = vld [vmem:[%s1 + $0x70] sm:$0xff]
        %v483 = vld [vmem:[%s1 + $0x78] sm:$0xff]
        %v484 = vld [vmem:[%s1 + $0x80] sm:$0xff]
        %v485 = vld [vmem:[%s1 + $0x88] sm:$0xff]
        %v486 = vld [vmem:[%s1 + $0x90] sm:$0xff]
        %v487 = vld [vmem:[%s1 + $0x98] sm:$0xff]
        %v508 = vunpack.c.l.b16 %v468
        %v509 = vunpack.c.h.b16 %v468
        %v510 = vunpack.c.l.b16 %v469
        %v511 = vunpack.c.h.b16 %v469
        %v512 = vunpack.c.l.b16 %v470
        %v513 = vunpack.c.h.b16 %v470
        %v514 = vunpack.c.l.b16 %v471
        %v515 = vunpack.c.h.b16 %v471
        %v516 = vunpack.c.l.b16 %v472
        %v517 = vunpack.c.h.b16 %v472
        %v518 = vunpack.c.l.b16 %v473
        %v519 = vunpack.c.h.b16 %v473
        %v520 = vunpack.c.l.b16 %v474
        %v521 = vunpack.c.h.b16 %v474
        %v522 = vunpack.c.l.b16 %v475
        %v523 = vunpack.c.h.b16 %v475
        %v524 = vunpack.c.l.b16 %v476
        %v525 = vunpack.c.h.b16 %v476
        %v526 = vunpack.c.l.b16 %v477
        %v527 = vunpack.c.h.b16 %v477
        %v528 = vunpack.c.l.b16 %v478
        %v529 = vunpack.c.h.b16 %v478
        %v530 = vunpack.c.l.b16 %v479
        %v531 = vunpack.c.h.b16 %v479
        %v532 = vunpack.c.l.b16 %v480
        %v533 = vunpack.c.h.b16 %v480
        %v534 = vunpack.c.l.b16 %v481
        %v535 = vunpack.c.h.b16 %v481
        %v536 = vunpack.c.l.b16 %v482
        %v537 = vunpack.c.h.b16 %v482
        %v538 = vunpack.c.l.b16 %v483
        %v539 = vunpack.c.h.b16 %v483
        %v540 = vunpack.c.l.b16 %v484
        %v541 = vunpack.c.h.b16 %v484
        %v542 = vunpack.c.l.b16 %v485
        %v543 = vunpack.c.h.b16 %v485
        %v544 = vunpack.c.l.b16 %v486
        %v545 = vunpack.c.h.b16 %v486
        %v546 = vunpack.c.l.b16 %v487
        %v547 = vunpack.c.h.b16 %v487
        %v548 = vpack.c.b16 %v510, %v508
        %v549 = vpack.c.b16 %v511, %v509
        %v550 = vpack.c.b16 %v514, %v512
        %v551 = vpack.c.b16 %v515, %v513
        %v552 = vpack.c.b16 %v518, %v516
        %v553 = vpack.c.b16 %v519, %v517
        %v554 = vpack.c.b16 %v522, %v520
        %v555 = vpack.c.b16 %v523, %v521
        %v556 = vpack.c.b16 %v526, %v524
        %v557 = vpack.c.b16 %v527, %v525
        %v558 = vpack.c.b16 %v530, %v528
        %v559 = vpack.c.b16 %v531, %v529
        %v560 = vpack.c.b16 %v534, %v532
        %v561 = vpack.c.b16 %v535, %v533
        %v562 = vpack.c.b16 %v538, %v536
        %v563 = vpack.c.b16 %v539, %v537
        %v564 = vpack.c.b16 %v542, %v540
        %v565 = vpack.c.b16 %v543, %v541
        %v566 = vpack.c.b16 %v546, %v544
        %v567 = vpack.c.b16 %v547, %v545
        %v589 = vsel %vm460, %v467, 0
        %591 = vmatprep.subr.bf16.mxu0 %v549
        %592 = vmatpush1.bf16.msra.mxu0 %v548
        %593 = vmatprep.subr.bf16.mxu0 %v551
        %594 = vmatpush1.bf16.msra.mxu0 %v550
        %595 = vmatprep.subr.bf16.mxu0 %v553
        %596 = vmatpush1.bf16.msra.mxu0 %v552
        %597 = vmatprep.subr.bf16.mxu0 %v555
        %598 = vmatpush1.bf16.msra.mxu0 %v554
        %599 = vmatprep.subr.bf16.mxu0 %v557
        %600 = vmatpush1.bf16.msra.mxu0 %v556
        %601 = vmatprep.subr.bf16.mxu0 %v559
        %602 = vmatpush1.bf16.msra.mxu0 %v558
        %603 = vmatprep.subr.bf16.mxu0 %v561
        %604 = vmatpush1.bf16.msra.mxu0 %v560
        %605 = vmatprep.subr.bf16.mxu0 %v563
        %606 = vmatpush1.bf16.msra.mxu0 %v562
        %607 = vmatprep.subr.bf16.mxu0 %v565
        %608 = vmatpush1.bf16.msra.mxu0 %v564
        %609 = vmatprep.subr.bf16.mxu0 %v567
        %610 = vmatpush1.bf16.msra.mxu0 %v566
        %611 = vmatprep.subr.bf16.mxu0 0
        %612 = vmatpush1.bf16.msra.mxu0 0
        %613 = vmatprep.subr.bf16.mxu0 0
        %614 = vmatpush1.bf16.msra.mxu0 0
        %615 = vmatprep.subr.bf16.mxu0 0
        %616 = vmatpush1.bf16.msra.mxu0 0
        %617 = vmatprep.subr.bf16.mxu0 0
        %618 = vmatpush1.bf16.msra.mxu0 0
        %619 = vmatprep.subr.bf16.mxu0 0
        %620 = vmatpush1.bf16.msra.mxu0 0
        %621 = vmatprep.subr.bf16.mxu0 0
        %622 = vmatpush1.bf16.msra.mxu0 0
        %623 = vmatprep.mubr.bf16.mxu0 %v589
        %624 = vmatmul.mubr.bf16.gmra.mrb[0].mxu0 %v466
        %v625 = vpop.f32.mrb[0].mxu0
        %v626 = vadd.f32 0.0, %v625
        %v627 = vpop.f32.mrb[0].mxu0
        %v628 = vadd.f32 0.0, %v627
        %v629 = vpop.f32.mrb[0].mxu0
        %v630 = vpop.f32.mrb[0].mxu0
        %631 = vdwg.mxu0
        %v632 = vld [vmem:[%s2] sm:$0x3]
        %v634 = vlaneseq
        %v635 = vshrl.u32 %v634, 7
        %v636 = vsub.s32 0, %v635
        %v637 = vrot.slane %v632, %v636
        %v638 = vlaneseq
        %v639 = vshrl.u32 %v638, 7
        %v640 = vsub.s32 1, %v639
        %v641 = vrot.slane %v632, %v640
        %v644 = vmul.f32 %v626, %v637
        %v645 = vmul.f32 %v628, %v641
        %v646 = vld [vmem:[%s3] sm:$0x3]
        %v648 = vlaneseq
        %v649 = vshrl.u32 %v648, 7
        %v650 = vsub.s32 0, %v649
        %v651 = vrot.slane %v646, %v650
        %v652 = vlaneseq
        %v653 = vshrl.u32 %v652, 7
        %v654 = vsub.s32 1, %v653
        %v655 = vrot.slane %v646, %v654
        %v658 = vadd.f32 %v644, %v651
        %v659 = vadd.f32 %v645, %v655
        %v660 = vmax.f32 %v658, 0.0
        %v661 = vmax.f32 %v659, 0.0
        %v664 = vrot.slane %v660, 6
        %v665 = vrot.slane %v661, 6
        %v668 = vsel %vm429, 0.0, %v664
        %v669 = vsel %vm429, 0.0, %v665
        %v670 = vsel %vm429, %v664, 0.0
        %v671 = vsel %vm429, %v665, 0.0
        %v676 = vrot.slane %v668, 1
        %v677 = vrot.slane %v670, 1
        %v678 = vsel %vm434, %v676, %v677
        %v679 = vrot.slane %v669, 1
        %v680 = vrot.slane %v671, 1
        %v681 = vsel %vm434, %v679, %v680
        %v684 = vrot.slane %v668, 2
        %v685 = vrot.slane %v670, 2
        %v686 = vsel %vm441, %v684, %v685
        %v687 = vrot.slane %v669, 2
        %v688 = vrot.slane %v671, 2
        %v689 = vsel %vm441, %v687, %v688
        %v692 = vrot.slane %v668, 3
        %v693 = vrot.slane %v670, 3
        %v694 = vsel %vm448, %v692, %v693
        %v695 = vrot.slane %v669, 3
        %v696 = vrot.slane %v671, 3
        %v697 = vsel %vm448, %v695, %v696
        %v700 = vrot.slane %v668, 4
        %v701 = vrot.slane %v670, 4
        %v702 = vsel %vm455, %v700, %v701
        %v703 = vrot.slane %v669, 4
        %v704 = vrot.slane %v671, 4
        %v705 = vsel %vm455, %v703, %v704
        %v708 = vpack.c.bf16 %v668, %v668
        %v709 = vpack.c.bf16 %v669, %v669
        %v710 = vpack.c.bf16 %v678, %v678
        %v711 = vpack.c.bf16 %v681, %v681
        %v712 = vpack.c.bf16 %v686, %v686
        %v713 = vpack.c.bf16 %v689, %v689
        %v714 = vpack.c.bf16 %v694, %v694
        %v715 = vpack.c.bf16 %v697, %v697
        %v716 = vpack.c.bf16 %v702, %v702
        %v717 = vpack.c.bf16 %v705, %v705
        %v718 = vld [vmem:[#allocation2] sm:$0xff]
        %v719 = vld [vmem:[#allocation2 + $0x8] sm:$0xff]
        %v720 = vld [vmem:[#allocation2 + $0x10] sm:$0xff]
        %v721 = vld [vmem:[#allocation2 + $0x18] sm:$0xff]
        %v722 = vld [vmem:[#allocation2 + $0x20] sm:$0xff]
        %v723 = vld [vmem:[#allocation2 + $0x28] sm:$0xff]
        %v724 = vld [vmem:[#allocation2 + $0x30] sm:$0xff]
        %v725 = vld [vmem:[#allocation2 + $0x38] sm:$0xff]
        %v726 = vld [vmem:[#allocation2 + $0x40] sm:$0xff]
        %v727 = vld [vmem:[#allocation2 + $0x48] sm:$0xff]
        %v728 = vld [vmem:[#allocation2 + $0x50] sm:$0xff]
        %v729 = vld [vmem:[#allocation2 + $0x58] sm:$0xff]
        %v730 = vld [vmem:[#allocation2 + $0x60] sm:$0xff]
        %v731 = vld [vmem:[#allocation2 + $0x68] sm:$0xff]
        %v732 = vld [vmem:[#allocation2 + $0x70] sm:$0xff]
        %v733 = vld [vmem:[#allocation2 + $0x78] sm:$0xff]
        %v734 = vld [vmem:[#allocation2 + $0x80] sm:$0xff]
        %v735 = vld [vmem:[#allocation2 + $0x88] sm:$0xff]
        %v736 = vld [vmem:[#allocation2 + $0x90] sm:$0xff]
        %v737 = vld [vmem:[#allocation2 + $0x98] sm:$0xff]
        %v738 = vld [vmem:[#allocation2 + $0xa0] sm:$0xff]
        %v739 = vld [vmem:[#allocation2 + $0xa8] sm:$0xff]
        %v740 = vld [vmem:[#allocation2 + $0xb0] sm:$0xff]
        %v741 = vld [vmem:[#allocation2 + $0xb8] sm:$0xff]
        %v742 = vld [vmem:[#allocation2 + $0xc0] sm:$0xff]
        %v743 = vld [vmem:[#allocation2 + $0xc8] sm:$0xff]
        %v744 = vld [vmem:[#allocation2 + $0xd0] sm:$0xff]
        %v745 = vld [vmem:[#allocation2 + $0xd8] sm:$0xff]
        %v746 = vld [vmem:[#allocation2 + $0xe0] sm:$0xff]
        %v747 = vld [vmem:[#allocation2 + $0xe8] sm:$0xff]
        %v748 = vld [vmem:[#allocation2 + $0xf0] sm:$0xff]
        %v749 = vld [vmem:[#allocation2 + $0xf8] sm:$0xff]
        %v750 = vld [vmem:[#allocation2 + $0x100] sm:$0xff]
        %v751 = vld [vmem:[#allocation2 + $0x108] sm:$0xff]
        %v752 = vld [vmem:[#allocation2 + $0x110] sm:$0xff]
        %v753 = vld [vmem:[#allocation2 + $0x118] sm:$0xff]
        %v754 = vld [vmem:[#allocation2 + $0x120] sm:$0xff]
        %v755 = vld [vmem:[#allocation2 + $0x128] sm:$0xff]
        %v756 = vld [vmem:[#allocation2 + $0x130] sm:$0xff]
        %v757 = vld [vmem:[#allocation2 + $0x138] sm:$0xff]
        %v758 = vld [vmem:[#allocation2 + $0x140] sm:$0xff]
        %v759 = vld [vmem:[#allocation2 + $0x148] sm:$0xff]
        %v760 = vld [vmem:[#allocation2 + $0x150] sm:$0xff]
        %v761 = vld [vmem:[#allocation2 + $0x158] sm:$0xff]
        %v762 = vld [vmem:[#allocation2 + $0x160] sm:$0xff]
        %v763 = vld [vmem:[#allocation2 + $0x168] sm:$0xff]
        %v764 = vld [vmem:[#allocation2 + $0x170] sm:$0xff]
        %v765 = vld [vmem:[#allocation2 + $0x178] sm:$0xff]
        %v766 = vld [vmem:[#allocation2 + $0x180] sm:$0xff]
        %v767 = vld [vmem:[#allocation2 + $0x188] sm:$0xff]
        %v768 = vld [vmem:[#allocation2 + $0x190] sm:$0xff]
        %v769 = vld [vmem:[#allocation2 + $0x198] sm:$0xff]
        %v770 = vld [vmem:[#allocation2 + $0x1a0] sm:$0xff]
        %v771 = vld [vmem:[#allocation2 + $0x1a8] sm:$0xff]
        %v772 = vld [vmem:[#allocation2 + $0x1b0] sm:$0xff]
        %v773 = vld [vmem:[#allocation2 + $0x1b8] sm:$0xff]
        %v774 = vld [vmem:[#allocation2 + $0x1c0] sm:$0xff]
        %v775 = vld [vmem:[#allocation2 + $0x1c8] sm:$0xff]
        %v776 = vld [vmem:[#allocation2 + $0x1d0] sm:$0xff]
        %v777 = vld [vmem:[#allocation2 + $0x1d8] sm:$0xff]
        %v778 = vld [vmem:[#allocation2 + $0x1e0] sm:$0xff]
        %v779 = vld [vmem:[#allocation2 + $0x1e8] sm:$0xff]
        %v780 = vld [vmem:[#allocation2 + $0x1f0] sm:$0xff]
        %v781 = vld [vmem:[#allocation2 + $0x1f8] sm:$0xff]
        %v782 = vld [vmem:[#allocation2 + $0x200] sm:$0xff]
        %v783 = vld [vmem:[#allocation2 + $0x208] sm:$0xff]
        %v784 = vld [vmem:[#allocation2 + $0x210] sm:$0xff]
        %v785 = vld [vmem:[#allocation2 + $0x218] sm:$0xff]
        %v786 = vld [vmem:[#allocation2 + $0x220] sm:$0xff]
        %v787 = vld [vmem:[#allocation2 + $0x228] sm:$0xff]
        %v788 = vld [vmem:[#allocation2 + $0x230] sm:$0xff]
        %v789 = vld [vmem:[#allocation2 + $0x238] sm:$0xff]
        %v790 = vld [vmem:[#allocation2 + $0x240] sm:$0xff]
        %v791 = vld [vmem:[#allocation2 + $0x248] sm:$0xff]
        %v792 = vld [vmem:[#allocation2 + $0x250] sm:$0xff]
        %v793 = vld [vmem:[#allocation2 + $0x258] sm:$0xff]
        %v794 = vld [vmem:[#allocation2 + $0x260] sm:$0xff]
        %v795 = vld [vmem:[#allocation2 + $0x268] sm:$0xff]
        %v796 = vld [vmem:[#allocation2 + $0x270] sm:$0xff]
        %v797 = vld [vmem:[#allocation2 + $0x278] sm:$0xff]
        %v798 = vld [vmem:[#allocation2 + $0x280] sm:$0xff]
        %v799 = vld [vmem:[#allocation2 + $0x288] sm:$0xff]
        %v800 = vld [vmem:[#allocation2 + $0x290] sm:$0xff]
        %v801 = vld [vmem:[#allocation2 + $0x298] sm:$0xff]
        %v802 = vld [vmem:[#allocation2 + $0x2a0] sm:$0xff]
        %v803 = vld [vmem:[#allocation2 + $0x2a8] sm:$0xff]
        %v804 = vld [vmem:[#allocation2 + $0x2b0] sm:$0xff]
        %v805 = vld [vmem:[#allocation2 + $0x2b8] sm:$0xff]
        %v806 = vld [vmem:[#allocation2 + $0x2c0] sm:$0xff]
        %v807 = vld [vmem:[#allocation2 + $0x2c8] sm:$0xff]
        %v808 = vld [vmem:[#allocation2 + $0x2d0] sm:$0xff]
        %v809 = vld [vmem:[#allocation2 + $0x2d8] sm:$0xff]
        %v810 = vld [vmem:[#allocation2 + $0x2e0] sm:$0xff]
        %v811 = vld [vmem:[#allocation2 + $0x2e8] sm:$0xff]
        %v812 = vld [vmem:[#allocation2 + $0x2f0] sm:$0xff]
        %v813 = vld [vmem:[#allocation2 + $0x2f8] sm:$0xff]
        %v814 = vld [vmem:[#allocation2 + $0x300] sm:$0xff]
        %v815 = vld [vmem:[#allocation2 + $0x308] sm:$0xff]
        %v816 = vld [vmem:[#allocation2 + $0x310] sm:$0xff]
        %v817 = vld [vmem:[#allocation2 + $0x318] sm:$0xff]
        %v818 = vld [vmem:[#allocation2 + $0x320] sm:$0xff]
        %v819 = vld [vmem:[#allocation2 + $0x328] sm:$0xff]
        %v820 = vld [vmem:[#allocation2 + $0x330] sm:$0xff]
        %v821 = vld [vmem:[#allocation2 + $0x338] sm:$0xff]
        %v822 = vld [vmem:[#allocation2 + $0x340] sm:$0xff]
        %v823 = vld [vmem:[#allocation2 + $0x348] sm:$0xff]
        %v824 = vld [vmem:[#allocation2 + $0x350] sm:$0xff]
        %v825 = vld [vmem:[#allocation2 + $0x358] sm:$0xff]
        %v826 = vld [vmem:[#allocation2 + $0x360] sm:$0xff]
        %v827 = vld [vmem:[#allocation2 + $0x368] sm:$0xff]
        %v828 = vld [vmem:[#allocation2 + $0x370] sm:$0xff]
        %v829 = vld [vmem:[#allocation2 + $0x378] sm:$0xff]
        %v830 = vld [vmem:[#allocation2 + $0x380] sm:$0xff]
        %v831 = vld [vmem:[#allocation2 + $0x388] sm:$0xff]
        %v832 = vld [vmem:[#allocation2 + $0x390] sm:$0xff]
        %v833 = vld [vmem:[#allocation2 + $0x398] sm:$0xff]
        %v834 = vld [vmem:[#allocation2 + $0x3a0] sm:$0xff]
        %v835 = vld [vmem:[#allocation2 + $0x3a8] sm:$0xff]
        %v836 = vld [vmem:[#allocation2 + $0x3b0] sm:$0xff]
        %v837 = vld [vmem:[#allocation2 + $0x3b8] sm:$0xff]
        %v838 = vld [vmem:[#allocation2 + $0x3c0] sm:$0xff]
        %v839 = vld [vmem:[#allocation2 + $0x3c8] sm:$0xff]
        %v840 = vld [vmem:[#allocation2 + $0x3d0] sm:$0xff]
        %v841 = vld [vmem:[#allocation2 + $0x3d8] sm:$0xff]
        %v842 = vld [vmem:[#allocation2 + $0x3e0] sm:$0xff]
        %v843 = vld [vmem:[#allocation2 + $0x3e8] sm:$0xff]
        %v844 = vld [vmem:[#allocation2 + $0x3f0] sm:$0xff]
        %v845 = vld [vmem:[#allocation2 + $0x3f8] sm:$0xff]
        %v846 = vld [vmem:[#allocation2 + $0x400] sm:$0xff]
        %v847 = vld [vmem:[#allocation2 + $0x408] sm:$0xff]
        %v848 = vld [vmem:[#allocation2 + $0x410] sm:$0xff]
        %v849 = vld [vmem:[#allocation2 + $0x418] sm:$0xff]
        %v850 = vld [vmem:[#allocation2 + $0x420] sm:$0xff]
        %v851 = vld [vmem:[#allocation2 + $0x428] sm:$0xff]
        %v852 = vld [vmem:[#allocation2 + $0x430] sm:$0xff]
        %v853 = vld [vmem:[#allocation2 + $0x438] sm:$0xff]
        %v854 = vld [vmem:[#allocation2 + $0x440] sm:$0xff]
        %v855 = vld [vmem:[#allocation2 + $0x448] sm:$0xff]
        %v856 = vld [vmem:[#allocation2 + $0x450] sm:$0xff]
        %v857 = vld [vmem:[#allocation2 + $0x458] sm:$0xff]
        %v858 = vld [vmem:[#allocation2 + $0x460] sm:$0xff]
        %v859 = vld [vmem:[#allocation2 + $0x468] sm:$0xff]
        %v860 = vld [vmem:[#allocation2 + $0x470] sm:$0xff]
        %v861 = vld [vmem:[#allocation2 + $0x478] sm:$0xff]
        %v862 = vld [vmem:[#allocation2 + $0x480] sm:$0xff]
        %v863 = vld [vmem:[#allocation2 + $0x488] sm:$0xff]
        %v864 = vld [vmem:[#allocation2 + $0x490] sm:$0xff]
        %v865 = vld [vmem:[#allocation2 + $0x498] sm:$0xff]
        %v866 = vld [vmem:[#allocation2 + $0x4a0] sm:$0xff]
        %v867 = vld [vmem:[#allocation2 + $0x4a8] sm:$0xff]
        %v868 = vld [vmem:[#allocation2 + $0x4b0] sm:$0xff]
        %v869 = vld [vmem:[#allocation2 + $0x4b8] sm:$0xff]
        %v870 = vld [vmem:[#allocation2 + $0x4c0] sm:$0xff]
        %v871 = vld [vmem:[#allocation2 + $0x4c8] sm:$0xff]
        %v872 = vld [vmem:[#allocation2 + $0x4d0] sm:$0xff]
        %v873 = vld [vmem:[#allocation2 + $0x4d8] sm:$0xff]
        %v874 = vld [vmem:[#allocation2 + $0x4e0] sm:$0xff]
        %v875 = vld [vmem:[#allocation2 + $0x4e8] sm:$0xff]
        %v876 = vld [vmem:[#allocation2 + $0x4f0] sm:$0xff]
        %v877 = vld [vmem:[#allocation2 + $0x4f8] sm:$0xff]
        %v1038 = vunpack.c.l.b16 %v718
        %v1039 = vunpack.c.h.b16 %v718
        %v1040 = vunpack.c.l.b16 %v719
        %v1041 = vunpack.c.h.b16 %v719
        %v1042 = vunpack.c.l.b16 %v720
        %v1043 = vunpack.c.h.b16 %v720
        %v1044 = vunpack.c.l.b16 %v721
        %v1045 = vunpack.c.h.b16 %v721
        %v1046 = vunpack.c.l.b16 %v722
        %v1047 = vunpack.c.h.b16 %v722
        %v1048 = vunpack.c.l.b16 %v723
        %v1049 = vunpack.c.h.b16 %v723
        %v1050 = vunpack.c.l.b16 %v724
        %v1051 = vunpack.c.h.b16 %v724
        %v1052 = vunpack.c.l.b16 %v725
        %v1053 = vunpack.c.h.b16 %v725
        %v1054 = vunpack.c.l.b16 %v726
        %v1055 = vunpack.c.h.b16 %v726
        %v1056 = vunpack.c.l.b16 %v727
        %v1057 = vunpack.c.h.b16 %v727
        %v1058 = vunpack.c.l.b16 %v728
        %v1059 = vunpack.c.h.b16 %v728
        %v1060 = vunpack.c.l.b16 %v729
        %v1061 = vunpack.c.h.b16 %v729
        %v1062 = vunpack.c.l.b16 %v730
        %v1063 = vunpack.c.h.b16 %v730
        %v1064 = vunpack.c.l.b16 %v731
        %v1065 = vunpack.c.h.b16 %v731
        %v1066 = vunpack.c.l.b16 %v732
        %v1067 = vunpack.c.h.b16 %v732
        %v1068 = vunpack.c.l.b16 %v733
        %v1069 = vunpack.c.h.b16 %v733
        %v1070 = vunpack.c.l.b16 %v734
        %v1071 = vunpack.c.h.b16 %v734
        %v1072 = vunpack.c.l.b16 %v735
        %v1073 = vunpack.c.h.b16 %v735
        %v1074 = vunpack.c.l.b16 %v736
        %v1075 = vunpack.c.h.b16 %v736
        %v1076 = vunpack.c.l.b16 %v737
        %v1077 = vunpack.c.h.b16 %v737
        %v1078 = vunpack.c.l.b16 %v738
        %v1079 = vunpack.c.h.b16 %v738
        %v1080 = vunpack.c.l.b16 %v739
        %v1081 = vunpack.c.h.b16 %v739
        %v1082 = vunpack.c.l.b16 %v740
        %v1083 = vunpack.c.h.b16 %v740
        %v1084 = vunpack.c.l.b16 %v741
        %v1085 = vunpack.c.h.b16 %v741
        %v1086 = vunpack.c.l.b16 %v742
        %v1087 = vunpack.c.h.b16 %v742
        %v1088 = vunpack.c.l.b16 %v743
        %v1089 = vunpack.c.h.b16 %v743
        %v1090 = vunpack.c.l.b16 %v744
        %v1091 = vunpack.c.h.b16 %v744
        %v1092 = vunpack.c.l.b16 %v745
        %v1093 = vunpack.c.h.b16 %v745
        %v1094 = vunpack.c.l.b16 %v746
        %v1095 = vunpack.c.h.b16 %v746
        %v1096 = vunpack.c.l.b16 %v747
        %v1097 = vunpack.c.h.b16 %v747
        %v1098 = vunpack.c.l.b16 %v748
        %v1099 = vunpack.c.h.b16 %v748
        %v1100 = vunpack.c.l.b16 %v749
        %v1101 = vunpack.c.h.b16 %v749
        %v1102 = vunpack.c.l.b16 %v750
        %v1103 = vunpack.c.h.b16 %v750
        %v1104 = vunpack.c.l.b16 %v751
        %v1105 = vunpack.c.h.b16 %v751
        %v1106 = vunpack.c.l.b16 %v752
        %v1107 = vunpack.c.h.b16 %v752
        %v1108 = vunpack.c.l.b16 %v753
        %v1109 = vunpack.c.h.b16 %v753
        %v1110 = vunpack.c.l.b16 %v754
        %v1111 = vunpack.c.h.b16 %v754
        %v1112 = vunpack.c.l.b16 %v755
        %v1113 = vunpack.c.h.b16 %v755
        %v1114 = vunpack.c.l.b16 %v756
        %v1115 = vunpack.c.h.b16 %v756
        %v1116 = vunpack.c.l.b16 %v757
        %v1117 = vunpack.c.h.b16 %v757
        %v1118 = vunpack.c.l.b16 %v758
        %v1119 = vunpack.c.h.b16 %v758
        %v1120 = vunpack.c.l.b16 %v759
        %v1121 = vunpack.c.h.b16 %v759
        %v1122 = vunpack.c.l.b16 %v760
        %v1123 = vunpack.c.h.b16 %v760
        %v1124 = vunpack.c.l.b16 %v761
        %v1125 = vunpack.c.h.b16 %v761
        %v1126 = vunpack.c.l.b16 %v762
        %v1127 = vunpack.c.h.b16 %v762
        %v1128 = vunpack.c.l.b16 %v763
        %v1129 = vunpack.c.h.b16 %v763
        %v1130 = vunpack.c.l.b16 %v764
        %v1131 = vunpack.c.h.b16 %v764
        %v1132 = vunpack.c.l.b16 %v765
        %v1133 = vunpack.c.h.b16 %v765
        %v1134 = vunpack.c.l.b16 %v766
        %v1135 = vunpack.c.h.b16 %v766
        %v1136 = vunpack.c.l.b16 %v767
        %v1137 = vunpack.c.h.b16 %v767
        %v1138 = vunpack.c.l.b16 %v768
        %v1139 = vunpack.c.h.b16 %v768
        %v1140 = vunpack.c.l.b16 %v769
        %v1141 = vunpack.c.h.b16 %v769
        %v1142 = vunpack.c.l.b16 %v770
        %v1143 = vunpack.c.h.b16 %v770
        %v1144 = vunpack.c.l.b16 %v771
        %v1145 = vunpack.c.h.b16 %v771
        %v1146 = vunpack.c.l.b16 %v772
        %v1147 = vunpack.c.h.b16 %v772
        %v1148 = vunpack.c.l.b16 %v773
        %v1149 = vunpack.c.h.b16 %v773
        %v1150 = vunpack.c.l.b16 %v774
        %v1151 = vunpack.c.h.b16 %v774
        %v1152 = vunpack.c.l.b16 %v775
        %v1153 = vunpack.c.h.b16 %v775
        %v1154 = vunpack.c.l.b16 %v776
        %v1155 = vunpack.c.h.b16 %v776
        %v1156 = vunpack.c.l.b16 %v777
        %v1157 = vunpack.c.h.b16 %v777
        %v1158 = vunpack.c.l.b16 %v778
        %v1159 = vunpack.c.h.b16 %v778
        %v1160 = vunpack.c.l.b16 %v779
        %v1161 = vunpack.c.h.b16 %v779
        %v1162 = vunpack.c.l.b16 %v780
        %v1163 = vunpack.c.h.b16 %v780
        %v1164 = vunpack.c.l.b16 %v781
        %v1165 = vunpack.c.h.b16 %v781
        %v1166 = vunpack.c.l.b16 %v782
        %v1167 = vunpack.c.h.b16 %v782
        %v1168 = vunpack.c.l.b16 %v783
        %v1169 = vunpack.c.h.b16 %v783
        %v1170 = vunpack.c.l.b16 %v784
        %v1171 = vunpack.c.h.b16 %v784
        %v1172 = vunpack.c.l.b16 %v785
        %v1173 = vunpack.c.h.b16 %v785
        %v1174 = vunpack.c.l.b16 %v786
        %v1175 = vunpack.c.h.b16 %v786
        %v1176 = vunpack.c.l.b16 %v787
        %v1177 = vunpack.c.h.b16 %v787
        %v1178 = vunpack.c.l.b16 %v788
        %v1179 = vunpack.c.h.b16 %v788
        %v1180 = vunpack.c.l.b16 %v789
        %v1181 = vunpack.c.h.b16 %v789
        %v1182 = vunpack.c.l.b16 %v790
        %v1183 = vunpack.c.h.b16 %v790
        %v1184 = vunpack.c.l.b16 %v791
        %v1185 = vunpack.c.h.b16 %v791
        %v1186 = vunpack.c.l.b16 %v792
        %v1187 = vunpack.c.h.b16 %v792
        %v1188 = vunpack.c.l.b16 %v793
        %v1189 = vunpack.c.h.b16 %v793
        %v1190 = vunpack.c.l.b16 %v794
        %v1191 = vunpack.c.h.b16 %v794
        %v1192 = vunpack.c.l.b16 %v795
        %v1193 = vunpack.c.h.b16 %v795
        %v1194 = vunpack.c.l.b16 %v796
        %v1195 = vunpack.c.h.b16 %v796
        %v1196 = vunpack.c.l.b16 %v797
        %v1197 = vunpack.c.h.b16 %v797
        %v1198 = vunpack.c.l.b16 %v798
        %v1199 = vunpack.c.h.b16 %v798
        %v1200 = vunpack.c.l.b16 %v799
        %v1201 = vunpack.c.h.b16 %v799
        %v1202 = vunpack.c.l.b16 %v800
        %v1203 = vunpack.c.h.b16 %v800
        %v1204 = vunpack.c.l.b16 %v801
        %v1205 = vunpack.c.h.b16 %v801
        %v1206 = vunpack.c.l.b16 %v802
        %v1207 = vunpack.c.h.b16 %v802
        %v1208 = vunpack.c.l.b16 %v803
        %v1209 = vunpack.c.h.b16 %v803
        %v1210 = vunpack.c.l.b16 %v804
        %v1211 = vunpack.c.h.b16 %v804
        %v1212 = vunpack.c.l.b16 %v805
        %v1213 = vunpack.c.h.b16 %v805
        %v1214 = vunpack.c.l.b16 %v806
        %v1215 = vunpack.c.h.b16 %v806
        %v1216 = vunpack.c.l.b16 %v807
        %v1217 = vunpack.c.h.b16 %v807
        %v1218 = vunpack.c.l.b16 %v808
        %v1219 = vunpack.c.h.b16 %v808
        %v1220 = vunpack.c.l.b16 %v809
        %v1221 = vunpack.c.h.b16 %v809
        %v1222 = vunpack.c.l.b16 %v810
        %v1223 = vunpack.c.h.b16 %v810
        %v1224 = vunpack.c.l.b16 %v811
        %v1225 = vunpack.c.h.b16 %v811
        %v1226 = vunpack.c.l.b16 %v812
        %v1227 = vunpack.c.h.b16 %v812
        %v1228 = vunpack.c.l.b16 %v813
        %v1229 = vunpack.c.h.b16 %v813
        %v1230 = vunpack.c.l.b16 %v814
        %v1231 = vunpack.c.h.b16 %v814
        %v1232 = vunpack.c.l.b16 %v815
        %v1233 = vunpack.c.h.b16 %v815
        %v1234 = vunpack.c.l.b16 %v816
        %v1235 = vunpack.c.h.b16 %v816
        %v1236 = vunpack.c.l.b16 %v817
        %v1237 = vunpack.c.h.b16 %v817
        %v1238 = vunpack.c.l.b16 %v818
        %v1239 = vunpack.c.h.b16 %v818
        %v1240 = vunpack.c.l.b16 %v819
        %v1241 = vunpack.c.h.b16 %v819
        %v1242 = vunpack.c.l.b16 %v820
        %v1243 = vunpack.c.h.b16 %v820
        %v1244 = vunpack.c.l.b16 %v821
        %v1245 = vunpack.c.h.b16 %v821
        %v1246 = vunpack.c.l.b16 %v822
        %v1247 = vunpack.c.h.b16 %v822
        %v1248 = vunpack.c.l.b16 %v823
        %v1249 = vunpack.c.h.b16 %v823
        %v1250 = vunpack.c.l.b16 %v824
        %v1251 = vunpack.c.h.b16 %v824
        %v1252 = vunpack.c.l.b16 %v825
        %v1253 = vunpack.c.h.b16 %v825
        %v1254 = vunpack.c.l.b16 %v826
        %v1255 = vunpack.c.h.b16 %v826
        %v1256 = vunpack.c.l.b16 %v827
        %v1257 = vunpack.c.h.b16 %v827
        %v1258 = vunpack.c.l.b16 %v828
        %v1259 = vunpack.c.h.b16 %v828
        %v1260 = vunpack.c.l.b16 %v829
        %v1261 = vunpack.c.h.b16 %v829
        %v1262 = vunpack.c.l.b16 %v830
        %v1263 = vunpack.c.h.b16 %v830
        %v1264 = vunpack.c.l.b16 %v831
        %v1265 = vunpack.c.h.b16 %v831
        %v1266 = vunpack.c.l.b16 %v832
        %v1267 = vunpack.c.h.b16 %v832
        %v1268 = vunpack.c.l.b16 %v833
        %v1269 = vunpack.c.h.b16 %v833
        %v1270 = vunpack.c.l.b16 %v834
        %v1271 = vunpack.c.h.b16 %v834
        %v1272 = vunpack.c.l.b16 %v835
        %v1273 = vunpack.c.h.b16 %v835
        %v1274 = vunpack.c.l.b16 %v836
        %v1275 = vunpack.c.h.b16 %v836
        %v1276 = vunpack.c.l.b16 %v837
        %v1277 = vunpack.c.h.b16 %v837
        %v1278 = vunpack.c.l.b16 %v838
        %v1279 = vunpack.c.h.b16 %v838
        %v1280 = vunpack.c.l.b16 %v839
        %v1281 = vunpack.c.h.b16 %v839
        %v1282 = vunpack.c.l.b16 %v840
        %v1283 = vunpack.c.h.b16 %v840
        %v1284 = vunpack.c.l.b16 %v841
        %v1285 = vunpack.c.h.b16 %v841
        %v1286 = vunpack.c.l.b16 %v842
        %v1287 = vunpack.c.h.b16 %v842
        %v1288 = vunpack.c.l.b16 %v843
        %v1289 = vunpack.c.h.b16 %v843
        %v1290 = vunpack.c.l.b16 %v844
        %v1291 = vunpack.c.h.b16 %v844
        %v1292 = vunpack.c.l.b16 %v845
        %v1293 = vunpack.c.h.b16 %v845
        %v1294 = vunpack.c.l.b16 %v846
        %v1295 = vunpack.c.h.b16 %v846
        %v1296 = vunpack.c.l.b16 %v847
        %v1297 = vunpack.c.h.b16 %v847
        %v1298 = vunpack.c.l.b16 %v848
        %v1299 = vunpack.c.h.b16 %v848
        %v1300 = vunpack.c.l.b16 %v849
        %v1301 = vunpack.c.h.b16 %v849
        %v1302 = vunpack.c.l.b16 %v850
        %v1303 = vunpack.c.h.b16 %v850
        %v1304 = vunpack.c.l.b16 %v851
        %v1305 = vunpack.c.h.b16 %v851
        %v1306 = vunpack.c.l.b16 %v852
        %v1307 = vunpack.c.h.b16 %v852
        %v1308 = vunpack.c.l.b16 %v853
        %v1309 = vunpack.c.h.b16 %v853
        %v1310 = vunpack.c.l.b16 %v854
        %v1311 = vunpack.c.h.b16 %v854
        %v1312 = vunpack.c.l.b16 %v855
        %v1313 = vunpack.c.h.b16 %v855
        %v1314 = vunpack.c.l.b16 %v856
        %v1315 = vunpack.c.h.b16 %v856
        %v1316 = vunpack.c.l.b16 %v857
        %v1317 = vunpack.c.h.b16 %v857
        %v1318 = vunpack.c.l.b16 %v858
        %v1319 = vunpack.c.h.b16 %v858
        %v1320 = vunpack.c.l.b16 %v859
        %v1321 = vunpack.c.h.b16 %v859
        %v1322 = vunpack.c.l.b16 %v860
        %v1323 = vunpack.c.h.b16 %v860
        %v1324 = vunpack.c.l.b16 %v861
        %v1325 = vunpack.c.h.b16 %v861
        %v1326 = vunpack.c.l.b16 %v862
        %v1327 = vunpack.c.h.b16 %v862
        %v1328 = vunpack.c.l.b16 %v863
        %v1329 = vunpack.c.h.b16 %v863
        %v1330 = vunpack.c.l.b16 %v864
        %v1331 = vunpack.c.h.b16 %v864
        %v1332 = vunpack.c.l.b16 %v865
        %v1333 = vunpack.c.h.b16 %v865
        %v1334 = vunpack.c.l.b16 %v866
        %v1335 = vunpack.c.h.b16 %v866
        %v1336 = vunpack.c.l.b16 %v867
        %v1337 = vunpack.c.h.b16 %v867
        %v1338 = vunpack.c.l.b16 %v868
        %v1339 = vunpack.c.h.b16 %v868
        %v1340 = vunpack.c.l.b16 %v869
        %v1341 = vunpack.c.h.b16 %v869
        %v1342 = vunpack.c.l.b16 %v870
        %v1343 = vunpack.c.h.b16 %v870
        %v1344 = vunpack.c.l.b16 %v871
        %v1345 = vunpack.c.h.b16 %v871
        %v1346 = vunpack.c.l.b16 %v872
        %v1347 = vunpack.c.h.b16 %v872
        %v1348 = vunpack.c.l.b16 %v873
        %v1349 = vunpack.c.h.b16 %v873
        %v1350 = vunpack.c.l.b16 %v874
        %v1351 = vunpack.c.h.b16 %v874
        %v1352 = vunpack.c.l.b16 %v875
        %v1353 = vunpack.c.h.b16 %v875
        %v1354 = vunpack.c.l.b16 %v876
        %v1355 = vunpack.c.h.b16 %v876
        %v1356 = vunpack.c.l.b16 %v877
        %v1357 = vunpack.c.h.b16 %v877
        %v1358 = vpack.c.b16 %v1040, %v1038
        %v1359 = vpack.c.b16 %v1041, %v1039
        %v1360 = vpack.c.b16 %v1044, %v1042
        %v1361 = vpack.c.b16 %v1045, %v1043
        %v1362 = vpack.c.b16 %v1048, %v1046
        %v1363 = vpack.c.b16 %v1049, %v1047
        %v1364 = vpack.c.b16 %v1052, %v1050
        %v1365 = vpack.c.b16 %v1053, %v1051
        %v1366 = vpack.c.b16 %v1056, %v1054
        %v1367 = vpack.c.b16 %v1057, %v1055
        %v1368 = vpack.c.b16 %v1060, %v1058
        %v1369 = vpack.c.b16 %v1061, %v1059
        %v1370 = vpack.c.b16 %v1064, %v1062
        %v1371 = vpack.c.b16 %v1065, %v1063
        %v1372 = vpack.c.b16 %v1068, %v1066
        %v1373 = vpack.c.b16 %v1069, %v1067
        %v1374 = vpack.c.b16 %v1072, %v1070
        %v1375 = vpack.c.b16 %v1073, %v1071
        %v1376 = vpack.c.b16 %v1076, %v1074
        %v1377 = vpack.c.b16 %v1077, %v1075
        %v1378 = vpack.c.b16 %v1080, %v1078
        %v1379 = vpack.c.b16 %v1081, %v1079
        %v1380 = vpack.c.b16 %v1084, %v1082
        %v1381 = vpack.c.b16 %v1085, %v1083
        %v1382 = vpack.c.b16 %v1088, %v1086
        %v1383 = vpack.c.b16 %v1089, %v1087
        %v1384 = vpack.c.b16 %v1092, %v1090
        %v1385 = vpack.c.b16 %v1093, %v1091
        %v1386 = vpack.c.b16 %v1096, %v1094
        %v1387 = vpack.c.b16 %v1097, %v1095
        %v1388 = vpack.c.b16 %v1100, %v1098
        %v1389 = vpack.c.b16 %v1101, %v1099
        %v1390 = vpack.c.b16 %v1104, %v1102
        %v1391 = vpack.c.b16 %v1105, %v1103
        %v1392 = vpack.c.b16 %v1108, %v1106
        %v1393 = vpack.c.b16 %v1109, %v1107
        %v1394 = vpack.c.b16 %v1112, %v1110
        %v1395 = vpack.c.b16 %v1113, %v1111
        %v1396 = vpack.c.b16 %v1116, %v1114
        %v1397 = vpack.c.b16 %v1117, %v1115
        %v1398 = vpack.c.b16 %v1120, %v1118
        %v1399 = vpack.c.b16 %v1121, %v1119
        %v1400 = vpack.c.b16 %v1124, %v1122
        %v1401 = vpack.c.b16 %v1125, %v1123
        %v1402 = vpack.c.b16 %v1128, %v1126
        %v1403 = vpack.c.b16 %v1129, %v1127
        %v1404 = vpack.c.b16 %v1132, %v1130
        %v1405 = vpack.c.b16 %v1133, %v1131
        %v1406 = vpack.c.b16 %v1136, %v1134
        %v1407 = vpack.c.b16 %v1137, %v1135
        %v1408 = vpack.c.b16 %v1140, %v1138
        %v1409 = vpack.c.b16 %v1141, %v1139
        %v1410 = vpack.c.b16 %v1144, %v1142
        %v1411 = vpack.c.b16 %v1145, %v1143
        %v1412 = vpack.c.b16 %v1148, %v1146
        %v1413 = vpack.c.b16 %v1149, %v1147
        %v1414 = vpack.c.b16 %v1152, %v1150
        %v1415 = vpack.c.b16 %v1153, %v1151
        %v1416 = vpack.c.b16 %v1156, %v1154
        %v1417 = vpack.c.b16 %v1157, %v1155
        %v1418 = vpack.c.b16 %v1160, %v1158
        %v1419 = vpack.c.b16 %v1161, %v1159
        %v1420 = vpack.c.b16 %v1164, %v1162
        %v1421 = vpack.c.b16 %v1165, %v1163
        %v1422 = vpack.c.b16 %v1168, %v1166
        %v1423 = vpack.c.b16 %v1169, %v1167
        %v1424 = vpack.c.b16 %v1172, %v1170
        %v1425 = vpack.c.b16 %v1173, %v1171
        %v1426 = vpack.c.b16 %v1176, %v1174
        %v1427 = vpack.c.b16 %v1177, %v1175
        %v1428 = vpack.c.b16 %v1180, %v1178
        %v1429 = vpack.c.b16 %v1181, %v1179
        %v1430 = vpack.c.b16 %v1184, %v1182
        %v1431 = vpack.c.b16 %v1185, %v1183
        %v1432 = vpack.c.b16 %v1188, %v1186
        %v1433 = vpack.c.b16 %v1189, %v1187
        %v1434 = vpack.c.b16 %v1192, %v1190
        %v1435 = vpack.c.b16 %v1193, %v1191
        %v1436 = vpack.c.b16 %v1196, %v1194
        %v1437 = vpack.c.b16 %v1197, %v1195
        %v1438 = vpack.c.b16 %v1200, %v1198
        %v1439 = vpack.c.b16 %v1201, %v1199
        %v1440 = vpack.c.b16 %v1204, %v1202
        %v1441 = vpack.c.b16 %v1205, %v1203
        %v1442 = vpack.c.b16 %v1208, %v1206
        %v1443 = vpack.c.b16 %v1209, %v1207
        %v1444 = vpack.c.b16 %v1212, %v1210
        %v1445 = vpack.c.b16 %v1213, %v1211
        %v1446 = vpack.c.b16 %v1216, %v1214
        %v1447 = vpack.c.b16 %v1217, %v1215
        %v1448 = vpack.c.b16 %v1220, %v1218
        %v1449 = vpack.c.b16 %v1221, %v1219
        %v1450 = vpack.c.b16 %v1224, %v1222
        %v1451 = vpack.c.b16 %v1225, %v1223
        %v1452 = vpack.c.b16 %v1228, %v1226
        %v1453 = vpack.c.b16 %v1229, %v1227
        %v1454 = vpack.c.b16 %v1232, %v1230
        %v1455 = vpack.c.b16 %v1233, %v1231
        %v1456 = vpack.c.b16 %v1236, %v1234
        %v1457 = vpack.c.b16 %v1237, %v1235
        %v1458 = vpack.c.b16 %v1240, %v1238
        %v1459 = vpack.c.b16 %v1241, %v1239
        %v1460 = vpack.c.b16 %v1244, %v1242
        %v1461 = vpack.c.b16 %v1245, %v1243
        %v1462 = vpack.c.b16 %v1248, %v1246
        %v1463 = vpack.c.b16 %v1249, %v1247
        %v1464 = vpack.c.b16 %v1252, %v1250
        %v1465 = vpack.c.b16 %v1253, %v1251
        %v1466 = vpack.c.b16 %v1256, %v1254
        %v1467 = vpack.c.b16 %v1257, %v1255
        %v1468 = vpack.c.b16 %v1260, %v1258
        %v1469 = vpack.c.b16 %v1261, %v1259
        %v1470 = vpack.c.b16 %v1264, %v1262
        %v1471 = vpack.c.b16 %v1265, %v1263
        %v1472 = vpack.c.b16 %v1268, %v1266
        %v1473 = vpack.c.b16 %v1269, %v1267
        %v1474 = vpack.c.b16 %v1272, %v1270
        %v1475 = vpack.c.b16 %v1273, %v1271
        %v1476 = vpack.c.b16 %v1276, %v1274
        %v1477 = vpack.c.b16 %v1277, %v1275
        %v1478 = vpack.c.b16 %v1280, %v1278
        %v1479 = vpack.c.b16 %v1281, %v1279
        %v1480 = vpack.c.b16 %v1284, %v1282
        %v1481 = vpack.c.b16 %v1285, %v1283
        %v1482 = vpack.c.b16 %v1288, %v1286
        %v1483 = vpack.c.b16 %v1289, %v1287
        %v1484 = vpack.c.b16 %v1292, %v1290
        %v1485 = vpack.c.b16 %v1293, %v1291
        %v1486 = vpack.c.b16 %v1296, %v1294
        %v1487 = vpack.c.b16 %v1297, %v1295
        %v1488 = vpack.c.b16 %v1300, %v1298
        %v1489 = vpack.c.b16 %v1301, %v1299
        %v1490 = vpack.c.b16 %v1304, %v1302
        %v1491 = vpack.c.b16 %v1305, %v1303
        %v1492 = vpack.c.b16 %v1308, %v1306
        %v1493 = vpack.c.b16 %v1309, %v1307
        %v1494 = vpack.c.b16 %v1312, %v1310
        %v1495 = vpack.c.b16 %v1313, %v1311
        %v1496 = vpack.c.b16 %v1316, %v1314
        %v1497 = vpack.c.b16 %v1317, %v1315
        %v1498 = vpack.c.b16 %v1320, %v1318
        %v1499 = vpack.c.b16 %v1321, %v1319
        %v1500 = vpack.c.b16 %v1324, %v1322
        %v1501 = vpack.c.b16 %v1325, %v1323
        %v1502 = vpack.c.b16 %v1328, %v1326
        %v1503 = vpack.c.b16 %v1329, %v1327
        %v1504 = vpack.c.b16 %v1332, %v1330
        %v1505 = vpack.c.b16 %v1333, %v1331
        %v1506 = vpack.c.b16 %v1336, %v1334
        %v1507 = vpack.c.b16 %v1337, %v1335
        %v1508 = vpack.c.b16 %v1340, %v1338
        %v1509 = vpack.c.b16 %v1341, %v1339
        %v1510 = vpack.c.b16 %v1344, %v1342
        %v1511 = vpack.c.b16 %v1345, %v1343
        %v1512 = vpack.c.b16 %v1348, %v1346
        %v1513 = vpack.c.b16 %v1349, %v1347
        %v1514 = vpack.c.b16 %v1352, %v1350
        %v1515 = vpack.c.b16 %v1353, %v1351
        %v1516 = vpack.c.b16 %v1356, %v1354
        %v1517 = vpack.c.b16 %v1357, %v1355
        %1678 = vmatprep.subr.bf16.mxu0 %v1359
        %1679 = vmatpush1.bf16.msra.mxu0 %v1358
        %1680 = vmatprep.subr.bf16.mxu0 %v1361
        %1681 = vmatpush1.bf16.msra.mxu0 %v1360
        %1682 = vmatprep.subr.bf16.mxu0 %v1363
        %1683 = vmatpush1.bf16.msra.mxu0 %v1362
        %1684 = vmatprep.subr.bf16.mxu0 %v1365
        %1685 = vmatpush1.bf16.msra.mxu0 %v1364
        %1686 = vmatprep.subr.bf16.mxu0 %v1367
        %1687 = vmatpush1.bf16.msra.mxu0 %v1366
        %1688 = vmatprep.subr.bf16.mxu0 %v1369
        %1689 = vmatpush1.bf16.msra.mxu0 %v1368
        %1690 = vmatprep.subr.bf16.mxu0 %v1371
        %1691 = vmatpush1.bf16.msra.mxu0 %v1370
        %1692 = vmatprep.subr.bf16.mxu0 %v1373
        %1693 = vmatpush1.bf16.msra.mxu0 %v1372
        %1694 = vmatprep.subr.bf16.mxu0 %v1375
        %1695 = vmatpush1.bf16.msra.mxu0 %v1374
        %1696 = vmatprep.subr.bf16.mxu0 %v1377
        %1697 = vmatpush1.bf16.msra.mxu0 %v1376
        %1698 = vmatprep.subr.bf16.mxu0 %v1379
        %1699 = vmatpush1.bf16.msra.mxu0 %v1378
        %1700 = vmatprep.subr.bf16.mxu0 %v1381
        %1701 = vmatpush1.bf16.msra.mxu0 %v1380
        %1702 = vmatprep.subr.bf16.mxu0 %v1383
        %1703 = vmatpush1.bf16.msra.mxu0 %v1382
        %1704 = vmatprep.subr.bf16.mxu0 %v1385
        %1705 = vmatpush1.bf16.msra.mxu0 %v1384
        %1706 = vmatprep.subr.bf16.mxu0 %v1387
        %1707 = vmatpush1.bf16.msra.mxu0 %v1386
        %1708 = vmatprep.subr.bf16.mxu0 %v1389
        %1709 = vmatpush1.bf16.msra.mxu0 %v1388
        %1710 = vmatprep.mubr.bf16.mxu0 %v709
        %1711 = vmatmul.mubr.bf16.gmra.mrb[0].mxu0 %v708
        %v1712 = vpop.f32.mrb[0].mxu0
        %v1713 = vadd.f32 0.0, %v1712
        %v1714 = vpop.f32.mrb[0].mxu0
        %v1715 = vadd.f32 0.0, %v1714
        %v1716 = vpop.f32.mrb[0].mxu0
        %v1717 = vpop.f32.mrb[0].mxu0
        %1718 = vdwg.mxu0
        %1719 = vmatprep.subr.bf16.mxu0 %v1391
        %1720 = vmatpush1.bf16.msra.mxu0 %v1390
        %1721 = vmatprep.subr.bf16.mxu0 %v1393
        %1722 = vmatpush1.bf16.msra.mxu0 %v1392
        %1723 = vmatprep.subr.bf16.mxu0 %v1395
        %1724 = vmatpush1.bf16.msra.mxu0 %v1394
        %1725 = vmatprep.subr.bf16.mxu0 %v1397
        %1726 = vmatpush1.bf16.msra.mxu0 %v1396
        %1727 = vmatprep.subr.bf16.mxu0 %v1399
        %1728 = vmatpush1.bf16.msra.mxu0 %v1398
        %1729 = vmatprep.subr.bf16.mxu0 %v1401
        %1730 = vmatpush1.bf16.msra.mxu0 %v1400
        %1731 = vmatprep.subr.bf16.mxu0 %v1403
        %1732 = vmatpush1.bf16.msra.mxu0 %v1402
        %1733 = vmatprep.subr.bf16.mxu0 %v1405
        %1734 = vmatpush1.bf16.msra.mxu0 %v1404
        %1735 = vmatprep.subr.bf16.mxu0 %v1407
        %1736 = vmatpush1.bf16.msra.mxu0 %v1406
        %1737 = vmatprep.subr.bf16.mxu0 %v1409
        %1738 = vmatpush1.bf16.msra.mxu0 %v1408
        %1739 = vmatprep.subr.bf16.mxu0 %v1411
        %1740 = vmatpush1.bf16.msra.mxu0 %v1410
        %1741 = vmatprep.subr.bf16.mxu0 %v1413
        %1742 = vmatpush1.bf16.msra.mxu0 %v1412
        %1743 = vmatprep.subr.bf16.mxu0 %v1415
        %1744 = vmatpush1.bf16.msra.mxu0 %v1414
        %1745 = vmatprep.subr.bf16.mxu0 %v1417
        %1746 = vmatpush1.bf16.msra.mxu0 %v1416
        %1747 = vmatprep.subr.bf16.mxu0 %v1419
        %1748 = vmatpush1.bf16.msra.mxu0 %v1418
        %1749 = vmatprep.subr.bf16.mxu0 %v1421
        %1750 = vmatpush1.bf16.msra.mxu0 %v1420
        %1751 = vmatprep.mubr.bf16.mxu0 %v711
        %1752 = vmatmul.mubr.bf16.gmra.mrb[0].mxu0 %v710
        %v1753 = vpop.f32.mrb[0].mxu0
        %v1754 = vadd.f32 %v1713, %v1753
        %v1755 = vpop.f32.mrb[0].mxu0
        %v1756 = vadd.f32 %v1715, %v1755
        %v1757 = vpop.f32.mrb[0].mxu0
        %v1758 = vpop.f32.mrb[0].mxu0
        %1759 = vdwg.mxu0
        %1760 = vmatprep.subr.bf16.mxu0 %v1423
        %1761 = vmatpush1.bf16.msra.mxu0 %v1422
        %1762 = vmatprep.subr.bf16.mxu0 %v1425
        %1763 = vmatpush1.bf16.msra.mxu0 %v1424
        %1764 = vmatprep.subr.bf16.mxu0 %v1427
        %1765 = vmatpush1.bf16.msra.mxu0 %v1426
        %1766 = vmatprep.subr.bf16.mxu0 %v1429
        %1767 = vmatpush1.bf16.msra.mxu0 %v1428
        %1768 = vmatprep.subr.bf16.mxu0 %v1431
        %1769 = vmatpush1.bf16.msra.mxu0 %v1430
        %1770 = vmatprep.subr.bf16.mxu0 %v1433
        %1771 = vmatpush1.bf16.msra.mxu0 %v1432
        %1772 = vmatprep.subr.bf16.mxu0 %v1435
        %1773 = vmatpush1.bf16.msra.mxu0 %v1434
        %1774 = vmatprep.subr.bf16.mxu0 %v1437
        %1775 = vmatpush1.bf16.msra.mxu0 %v1436
        %1776 = vmatprep.subr.bf16.mxu0 %v1439
        %1777 = vmatpush1.bf16.msra.mxu0 %v1438
        %1778 = vmatprep.subr.bf16.mxu0 %v1441
        %1779 = vmatpush1.bf16.msra.mxu0 %v1440
        %1780 = vmatprep.subr.bf16.mxu0 %v1443
        %1781 = vmatpush1.bf16.msra.mxu0 %v1442
        %1782 = vmatprep.subr.bf16.mxu0 %v1445
        %1783 = vmatpush1.bf16.msra.mxu0 %v1444
        %1784 = vmatprep.subr.bf16.mxu0 %v1447
        %1785 = vmatpush1.bf16.msra.mxu0 %v1446
        %1786 = vmatprep.subr.bf16.mxu0 %v1449
        %1787 = vmatpush1.bf16.msra.mxu0 %v1448
        %1788 = vmatprep.subr.bf16.mxu0 %v1451
        %1789 = vmatpush1.bf16.msra.mxu0 %v1450
        %1790 = vmatprep.subr.bf16.mxu0 %v1453
        %1791 = vmatpush1.bf16.msra.mxu0 %v1452
        %1792 = vmatprep.mubr.bf16.mxu0 %v713
        %1793 = vmatmul.mubr.bf16.gmra.mrb[0].mxu0 %v712
        %v1794 = vpop.f32.mrb[0].mxu0
        %v1795 = vadd.f32 %v1754, %v1794
        %v1796 = vpop.f32.mrb[0].mxu0
        %v1797 = vadd.f32 %v1756, %v1796
        %v1798 = vpop.f32.mrb[0].mxu0
        %v1799 = vpop.f32.mrb[0].mxu0
        %1800 = vdwg.mxu0
        %1801 = vmatprep.subr.bf16.mxu0 %v1455
        %1802 = vmatpush1.bf16.msra.mxu0 %v1454
        %1803 = vmatprep.subr.bf16.mxu0 %v1457
        %1804 = vmatpush1.bf16.msra.mxu0 %v1456
        %1805 = vmatprep.subr.bf16.mxu0 %v1459
        %1806 = vmatpush1.bf16.msra.mxu0 %v1458
        %1807 = vmatprep.subr.bf16.mxu0 %v1461
        %1808 = vmatpush1.bf16.msra.mxu0 %v1460
        %1809 = vmatprep.subr.bf16.mxu0 %v1463
        %1810 = vmatpush1.bf16.msra.mxu0 %v1462
        %1811 = vmatprep.subr.bf16.mxu0 %v1465
        %1812 = vmatpush1.bf16.msra.mxu0 %v1464
        %1813 = vmatprep.subr.bf16.mxu0 %v1467
        %1814 = vmatpush1.bf16.msra.mxu0 %v1466
        %1815 = vmatprep.subr.bf16.mxu0 %v1469
        %1816 = vmatpush1.bf16.msra.mxu0 %v1468
        %1817 = vmatprep.subr.bf16.mxu0 %v1471
        %1818 = vmatpush1.bf16.msra.mxu0 %v1470
        %1819 = vmatprep.subr.bf16.mxu0 %v1473
        %1820 = vmatpush1.bf16.msra.mxu0 %v1472
        %1821 = vmatprep.subr.bf16.mxu0 %v1475
        %1822 = vmatpush1.bf16.msra.mxu0 %v1474
        %1823 = vmatprep.subr.bf16.mxu0 %v1477
        %1824 = vmatpush1.bf16.msra.mxu0 %v1476
        %1825 = vmatprep.subr.bf16.mxu0 %v1479
        %1826 = vmatpush1.bf16.msra.mxu0 %v1478
        %1827 = vmatprep.subr.bf16.mxu0 %v1481
        %1828 = vmatpush1.bf16.msra.mxu0 %v1480
        %1829 = vmatprep.subr.bf16.mxu0 %v1483
        %1830 = vmatpush1.bf16.msra.mxu0 %v1482
        %1831 = vmatprep.subr.bf16.mxu0 %v1485
        %1832 = vmatpush1.bf16.msra.mxu0 %v1484
        %1833 = vmatprep.mubr.bf16.mxu0 %v715
        %1834 = vmatmul.mubr.bf16.gmra.mrb[0].mxu0 %v714
        %v1835 = vpop.f32.mrb[0].mxu0
        %v1836 = vadd.f32 %v1795, %v1835
        %v1837 = vpop.f32.mrb[0].mxu0
        %v1838 = vadd.f32 %v1797, %v1837
        %v1839 = vpop.f32.mrb[0].mxu0
        %v1840 = vpop.f32.mrb[0].mxu0
        %1841 = vdwg.mxu0
        %1842 = vmatprep.subr.bf16.mxu0 %v1487
        %1843 = vmatpush1.bf16.msra.mxu0 %v1486
        %1844 = vmatprep.subr.bf16.mxu0 %v1489
        %1845 = vmatpush1.bf16.msra.mxu0 %v1488
        %1846 = vmatprep.subr.bf16.mxu0 %v1491
        %1847 = vmatpush1.bf16.msra.mxu0 %v1490
        %1848 = vmatprep.subr.bf16.mxu0 %v1493
        %1849 = vmatpush1.bf16.msra.mxu0 %v1492
        %1850 = vmatprep.subr.bf16.mxu0 %v1495
        %1851 = vmatpush1.bf16.msra.mxu0 %v1494
        %1852 = vmatprep.subr.bf16.mxu0 %v1497
        %1853 = vmatpush1.bf16.msra.mxu0 %v1496
        %1854 = vmatprep.subr.bf16.mxu0 %v1499
        %1855 = vmatpush1.bf16.msra.mxu0 %v1498
        %1856 = vmatprep.subr.bf16.mxu0 %v1501
        %1857 = vmatpush1.bf16.msra.mxu0 %v1500
        %1858 = vmatprep.subr.bf16.mxu0 %v1503
        %1859 = vmatpush1.bf16.msra.mxu0 %v1502
        %1860 = vmatprep.subr.bf16.mxu0 %v1505
        %1861 = vmatpush1.bf16.msra.mxu0 %v1504
        %1862 = vmatprep.subr.bf16.mxu0 %v1507
        %1863 = vmatpush1.bf16.msra.mxu0 %v1506
        %1864 = vmatprep.subr.bf16.mxu0 %v1509
        %1865 = vmatpush1.bf16.msra.mxu0 %v1508
        %1866 = vmatprep.subr.bf16.mxu0 %v1511
        %1867 = vmatpush1.bf16.msra.mxu0 %v1510
        %1868 = vmatprep.subr.bf16.mxu0 %v1513
        %1869 = vmatpush1.bf16.msra.mxu0 %v1512
        %1870 = vmatprep.subr.bf16.mxu0 %v1515
        %1871 = vmatpush1.bf16.msra.mxu0 %v1514
        %1872 = vmatprep.subr.bf16.mxu0 %v1517
        %1873 = vmatpush1.bf16.msra.mxu0 %v1516
        %1874 = vmatprep.mubr.bf16.mxu0 %v717
        %1875 = vmatmul.mubr.bf16.gmra.mrb[0].mxu0 %v716
        %v1876 = vpop.f32.mrb[0].mxu0
        %v1877 = vadd.f32 %v1836, %v1876
        %v1878 = vpop.f32.mrb[0].mxu0
        %v1879 = vadd.f32 %v1838, %v1878
        %v1880 = vpop.f32.mrb[0].mxu0
        %v1881 = vpop.f32.mrb[0].mxu0
        %1882 = vdwg.mxu0
        %v1883 = vld [vmem:[%s5] sm:$0x3]
        %v1885 = vlaneseq
        %v1886 = vshrl.u32 %v1885, 7
        %v1887 = vsub.s32 0, %v1886
        %v1888 = vrot.slane %v1883, %v1887
        %v1889 = vlaneseq
        %v1890 = vshrl.u32 %v1889, 7
        %v1891 = vsub.s32 1, %v1890
        %v1892 = vrot.slane %v1883, %v1891
        %v1895 = vmul.f32 %v1877, %v1888
        %v1896 = vmul.f32 %v1879, %v1892
        %v1897 = vld [vmem:[%s6] sm:$0x3]
        %v1899 = vlaneseq
        %v1900 = vshrl.u32 %v1899, 7
        %v1901 = vsub.s32 0, %v1900
        %v1902 = vrot.slane %v1897, %v1901
        %v1903 = vlaneseq
        %v1904 = vshrl.u32 %v1903, 7
        %v1905 = vsub.s32 1, %v1904
        %v1906 = vrot.slane %v1897, %v1905
        %v1909 = vadd.f32 %v1895, %v1902
        %v1910 = vadd.f32 %v1896, %v1906
        %v1911 = vmax.f32 %v1909, 0.0
        %v1912 = vmax.f32 %v1910, 0.0
        %v1915 = vrot.slane %v1911, 6
        %v1916 = vrot.slane %v1912, 6
        %v1919 = vsel %vm429, 0.0, %v1915
        %v1920 = vsel %vm429, 0.0, %v1916
        %v1921 = vsel %vm429, %v1915, 0.0
        %v1922 = vsel %vm429, %v1916, 0.0
        %v1927 = vrot.slane %v1919, 1
        %v1928 = vrot.slane %v1921, 1
        %v1929 = vsel %vm434, %v1927, %v1928
        %v1930 = vrot.slane %v1920, 1
        %v1931 = vrot.slane %v1922, 1
        %v1932 = vsel %vm434, %v1930, %v1931
        %v1935 = vrot.slane %v1919, 2
        %v1936 = vrot.slane %v1921, 2
        %v1937 = vsel %vm441, %v1935, %v1936
        %v1938 = vrot.slane %v1920, 2
        %v1939 = vrot.slane %v1922, 2
        %v1940 = vsel %vm441, %v1938, %v1939
        %v1943 = vrot.slane %v1919, 3
        %v1944 = vrot.slane %v1921, 3
        %v1945 = vsel %vm448, %v1943, %v1944
        %v1946 = vrot.slane %v1920, 3
        %v1947 = vrot.slane %v1922, 3
        %v1948 = vsel %vm448, %v1946, %v1947
        %v1951 = vrot.slane %v1919, 4
        %v1952 = vrot.slane %v1921, 4
        %v1953 = vsel %vm455, %v1951, %v1952
        %v1954 = vrot.slane %v1920, 4
        %v1955 = vrot.slane %v1922, 4
        %v1956 = vsel %vm455, %v1954, %v1955
        %v1959 = vpack.c.bf16 %v1919, %v1919
        %v1960 = vpack.c.bf16 %v1920, %v1920
        %v1961 = vpack.c.bf16 %v1929, %v1929
        %v1962 = vpack.c.bf16 %v1932, %v1932
        %v1963 = vpack.c.bf16 %v1937, %v1937
        %v1964 = vpack.c.bf16 %v1940, %v1940
        %v1965 = vpack.c.bf16 %v1945, %v1945
        %v1966 = vpack.c.bf16 %v1948, %v1948
        %v1967 = vpack.c.bf16 %v1953, %v1953
        %v1968 = vpack.c.bf16 %v1956, %v1956
        %v1969 = vld [vmem:[%s7] sm:$0xf]
        %v1970 = vld [vmem:[%s7 + $0x4] sm:$0xf]
        %v1971 = vld [vmem:[%s7 + $0x8] sm:$0xf]
        %v1972 = vld [vmem:[%s7 + $0xc] sm:$0xf]
        %v1973 = vld [vmem:[%s7 + $0x10] sm:$0xf]
        %v1974 = vld [vmem:[%s7 + $0x14] sm:$0xf]
        %v1975 = vld [vmem:[%s7 + $0x18] sm:$0xf]
        %v1976 = vld [vmem:[%s7 + $0x1c] sm:$0xf]
        %v1977 = vld [vmem:[%s7 + $0x20] sm:$0xf]
        %v1978 = vld [vmem:[%s7 + $0x24] sm:$0xf]
        %v1979 = vld [vmem:[%s7 + $0x28] sm:$0xf]
        %v1980 = vld [vmem:[%s7 + $0x2c] sm:$0xf]
        %v1981 = vld [vmem:[%s7 + $0x30] sm:$0xf]
        %v1982 = vld [vmem:[%s7 + $0x34] sm:$0xf]
        %v1983 = vld [vmem:[%s7 + $0x38] sm:$0xf]
        %v1984 = vld [vmem:[%s7 + $0x3c] sm:$0xf]
        %v1985 = vld [vmem:[%s7 + $0x40] sm:$0xf]
        %v1986 = vld [vmem:[%s7 + $0x44] sm:$0xf]
        %v1987 = vld [vmem:[%s7 + $0x48] sm:$0xf]
        %v1988 = vld [vmem:[%s7 + $0x4c] sm:$0xf]
        %v1989 = vld [vmem:[%s7 + $0x50] sm:$0xf]
        %v1990 = vld [vmem:[%s7 + $0x54] sm:$0xf]
        %v1991 = vld [vmem:[%s7 + $0x58] sm:$0xf]
        %v1992 = vld [vmem:[%s7 + $0x5c] sm:$0xf]
        %v1993 = vld [vmem:[%s7 + $0x60] sm:$0xf]
        %v1994 = vld [vmem:[%s7 + $0x64] sm:$0xf]
        %v1995 = vld [vmem:[%s7 + $0x68] sm:$0xf]
        %v1996 = vld [vmem:[%s7 + $0x6c] sm:$0xf]
        %v1997 = vld [vmem:[%s7 + $0x70] sm:$0xf]
        %v1998 = vld [vmem:[%s7 + $0x74] sm:$0xf]
        %v1999 = vld [vmem:[%s7 + $0x78] sm:$0xf]
        %v2000 = vld [vmem:[%s7 + $0x7c] sm:$0xf]
        %v2001 = vld [vmem:[%s7 + $0x80] sm:$0xf]
        %v2002 = vld [vmem:[%s7 + $0x84] sm:$0xf]
        %v2003 = vld [vmem:[%s7 + $0x88] sm:$0xf]
        %v2004 = vld [vmem:[%s7 + $0x8c] sm:$0xf]
        %v2005 = vld [vmem:[%s7 + $0x90] sm:$0xf]
        %v2006 = vld [vmem:[%s7 + $0x94] sm:$0xf]
        %v2007 = vld [vmem:[%s7 + $0x98] sm:$0xf]
        %v2008 = vld [vmem:[%s7 + $0x9c] sm:$0xf]
        %v2009 = vld [vmem:[%s7 + $0xa0] sm:$0xf]
        %v2010 = vld [vmem:[%s7 + $0xa4] sm:$0xf]
        %v2011 = vld [vmem:[%s7 + $0xa8] sm:$0xf]
        %v2012 = vld [vmem:[%s7 + $0xac] sm:$0xf]
        %v2013 = vld [vmem:[%s7 + $0xb0] sm:$0xf]
        %v2014 = vld [vmem:[%s7 + $0xb4] sm:$0xf]
        %v2015 = vld [vmem:[%s7 + $0xb8] sm:$0xf]
        %v2016 = vld [vmem:[%s7 + $0xbc] sm:$0xf]
        %v2017 = vld [vmem:[%s7 + $0xc0] sm:$0xf]
        %v2018 = vld [vmem:[%s7 + $0xc4] sm:$0xf]
        %v2019 = vld [vmem:[%s7 + $0xc8] sm:$0xf]
        %v2020 = vld [vmem:[%s7 + $0xcc] sm:$0xf]
        %v2021 = vld [vmem:[%s7 + $0xd0] sm:$0xf]
        %v2022 = vld [vmem:[%s7 + $0xd4] sm:$0xf]
        %v2023 = vld [vmem:[%s7 + $0xd8] sm:$0xf]
        %v2024 = vld [vmem:[%s7 + $0xdc] sm:$0xf]
        %v2025 = vld [vmem:[%s7 + $0xe0] sm:$0xf]
        %v2026 = vld [vmem:[%s7 + $0xe4] sm:$0xf]
        %v2027 = vld [vmem:[%s7 + $0xe8] sm:$0xf]
        %v2028 = vld [vmem:[%s7 + $0xec] sm:$0xf]
        %v2029 = vld [vmem:[%s7 + $0xf0] sm:$0xf]
        %v2030 = vld [vmem:[%s7 + $0xf4] sm:$0xf]
        %v2031 = vld [vmem:[%s7 + $0xf8] sm:$0xf]
        %v2032 = vld [vmem:[%s7 + $0xfc] sm:$0xf]
        %v2033 = vld [vmem:[%s7 + $0x100] sm:$0xf]
        %v2034 = vld [vmem:[%s7 + $0x104] sm:$0xf]
        %v2035 = vld [vmem:[%s7 + $0x108] sm:$0xf]
        %v2036 = vld [vmem:[%s7 + $0x10c] sm:$0xf]
        %v2037 = vld [vmem:[%s7 + $0x110] sm:$0xf]
        %v2038 = vld [vmem:[%s7 + $0x114] sm:$0xf]
        %v2039 = vld [vmem:[%s7 + $0x118] sm:$0xf]
        %v2040 = vld [vmem:[%s7 + $0x11c] sm:$0xf]
        %v2041 = vld [vmem:[%s7 + $0x120] sm:$0xf]
        %v2042 = vld [vmem:[%s7 + $0x124] sm:$0xf]
        %v2043 = vld [vmem:[%s7 + $0x128] sm:$0xf]
        %v2044 = vld [vmem:[%s7 + $0x12c] sm:$0xf]
        %v2045 = vld [vmem:[%s7 + $0x130] sm:$0xf]
        %v2046 = vld [vmem:[%s7 + $0x134] sm:$0xf]
        %v2047 = vld [vmem:[%s7 + $0x138] sm:$0xf]
        %v2048 = vld [vmem:[%s7 + $0x13c] sm:$0xf]
        %v2049 = vld [vmem:[%s7 + $0x140] sm:$0xf]
        %v2050 = vld [vmem:[%s7 + $0x144] sm:$0xf]
        %v2051 = vld [vmem:[%s7 + $0x148] sm:$0xf]
        %v2052 = vld [vmem:[%s7 + $0x14c] sm:$0xf]
        %v2053 = vld [vmem:[%s7 + $0x150] sm:$0xf]
        %v2054 = vld [vmem:[%s7 + $0x154] sm:$0xf]
        %v2055 = vld [vmem:[%s7 + $0x158] sm:$0xf]
        %v2056 = vld [vmem:[%s7 + $0x15c] sm:$0xf]
        %v2057 = vld [vmem:[%s7 + $0x160] sm:$0xf]
        %v2058 = vld [vmem:[%s7 + $0x164] sm:$0xf]
        %v2059 = vld [vmem:[%s7 + $0x168] sm:$0xf]
        %v2060 = vld [vmem:[%s7 + $0x16c] sm:$0xf]
        %v2061 = vld [vmem:[%s7 + $0x170] sm:$0xf]
        %v2062 = vld [vmem:[%s7 + $0x174] sm:$0xf]
        %v2063 = vld [vmem:[%s7 + $0x178] sm:$0xf]
        %v2064 = vld [vmem:[%s7 + $0x17c] sm:$0xf]
        %v2065 = vld [vmem:[%s7 + $0x180] sm:$0xf]
        %v2066 = vld [vmem:[%s7 + $0x184] sm:$0xf]
        %v2067 = vld [vmem:[%s7 + $0x188] sm:$0xf]
        %v2068 = vld [vmem:[%s7 + $0x18c] sm:$0xf]
        %v2069 = vld [vmem:[%s7 + $0x190] sm:$0xf]
        %v2070 = vld [vmem:[%s7 + $0x194] sm:$0xf]
        %v2071 = vld [vmem:[%s7 + $0x198] sm:$0xf]
        %v2072 = vld [vmem:[%s7 + $0x19c] sm:$0xf]
        %v2073 = vld [vmem:[%s7 + $0x1a0] sm:$0xf]
        %v2074 = vld [vmem:[%s7 + $0x1a4] sm:$0xf]
        %v2075 = vld [vmem:[%s7 + $0x1a8] sm:$0xf]
        %v2076 = vld [vmem:[%s7 + $0x1ac] sm:$0xf]
        %v2077 = vld [vmem:[%s7 + $0x1b0] sm:$0xf]
        %v2078 = vld [vmem:[%s7 + $0x1b4] sm:$0xf]
        %v2079 = vld [vmem:[%s7 + $0x1b8] sm:$0xf]
        %v2080 = vld [vmem:[%s7 + $0x1bc] sm:$0xf]
        %v2081 = vld [vmem:[%s7 + $0x1c0] sm:$0xf]
        %v2082 = vld [vmem:[%s7 + $0x1c4] sm:$0xf]
        %v2083 = vld [vmem:[%s7 + $0x1c8] sm:$0xf]
        %v2084 = vld [vmem:[%s7 + $0x1cc] sm:$0xf]
        %v2085 = vld [vmem:[%s7 + $0x1d0] sm:$0xf]
        %v2086 = vld [vmem:[%s7 + $0x1d4] sm:$0xf]
        %v2087 = vld [vmem:[%s7 + $0x1d8] sm:$0xf]
        %v2088 = vld [vmem:[%s7 + $0x1dc] sm:$0xf]
        %v2089 = vld [vmem:[%s7 + $0x1e0] sm:$0xf]
        %v2090 = vld [vmem:[%s7 + $0x1e4] sm:$0xf]
        %v2091 = vld [vmem:[%s7 + $0x1e8] sm:$0xf]
        %v2092 = vld [vmem:[%s7 + $0x1ec] sm:$0xf]
        %v2093 = vld [vmem:[%s7 + $0x1f0] sm:$0xf]
        %v2094 = vld [vmem:[%s7 + $0x1f4] sm:$0xf]
        %v2095 = vld [vmem:[%s7 + $0x1f8] sm:$0xf]
        %v2096 = vld [vmem:[%s7 + $0x1fc] sm:$0xf]
        %v2097 = vld [vmem:[%s7 + $0x200] sm:$0xf]
        %v2098 = vld [vmem:[%s7 + $0x204] sm:$0xf]
        %v2099 = vld [vmem:[%s7 + $0x208] sm:$0xf]
        %v2100 = vld [vmem:[%s7 + $0x20c] sm:$0xf]
        %v2101 = vld [vmem:[%s7 + $0x210] sm:$0xf]
        %v2102 = vld [vmem:[%s7 + $0x214] sm:$0xf]
        %v2103 = vld [vmem:[%s7 + $0x218] sm:$0xf]
        %v2104 = vld [vmem:[%s7 + $0x21c] sm:$0xf]
        %v2105 = vld [vmem:[%s7 + $0x220] sm:$0xf]
        %v2106 = vld [vmem:[%s7 + $0x224] sm:$0xf]
        %v2107 = vld [vmem:[%s7 + $0x228] sm:$0xf]
        %v2108 = vld [vmem:[%s7 + $0x22c] sm:$0xf]
        %v2109 = vld [vmem:[%s7 + $0x230] sm:$0xf]
        %v2110 = vld [vmem:[%s7 + $0x234] sm:$0xf]
        %v2111 = vld [vmem:[%s7 + $0x238] sm:$0xf]
        %v2112 = vld [vmem:[%s7 + $0x23c] sm:$0xf]
        %v2113 = vld [vmem:[%s7 + $0x240] sm:$0xf]
        %v2114 = vld [vmem:[%s7 + $0x244] sm:$0xf]
        %v2115 = vld [vmem:[%s7 + $0x248] sm:$0xf]
        %v2116 = vld [vmem:[%s7 + $0x24c] sm:$0xf]
        %v2117 = vld [vmem:[%s7 + $0x250] sm:$0xf]
        %v2118 = vld [vmem:[%s7 + $0x254] sm:$0xf]
        %v2119 = vld [vmem:[%s7 + $0x258] sm:$0xf]
        %v2120 = vld [vmem:[%s7 + $0x25c] sm:$0xf]
        %v2121 = vld [vmem:[%s7 + $0x260] sm:$0xf]
        %v2122 = vld [vmem:[%s7 + $0x264] sm:$0xf]
        %v2123 = vld [vmem:[%s7 + $0x268] sm:$0xf]
        %v2124 = vld [vmem:[%s7 + $0x26c] sm:$0xf]
        %v2125 = vld [vmem:[%s7 + $0x270] sm:$0xf]
        %v2126 = vld [vmem:[%s7 + $0x274] sm:$0xf]
        %v2127 = vld [vmem:[%s7 + $0x278] sm:$0xf]
        %v2128 = vld [vmem:[%s7 + $0x27c] sm:$0xf]
        %v2289 = vunpack.c.l.b16 %v1969
        %v2290 = vunpack.c.l.b16 %v1970
        %v2291 = vunpack.c.l.b16 %v1971
        %v2292 = vunpack.c.l.b16 %v1972
        %v2293 = vunpack.c.l.b16 %v1973
        %v2294 = vunpack.c.l.b16 %v1974
        %v2295 = vunpack.c.l.b16 %v1975
        %v2296 = vunpack.c.l.b16 %v1976
        %v2297 = vunpack.c.l.b16 %v1977
        %v2298 = vunpack.c.l.b16 %v1978
        %v2299 = vunpack.c.l.b16 %v1979
        %v2300 = vunpack.c.l.b16 %v1980
        %v2301 = vunpack.c.l.b16 %v1981
        %v2302 = vunpack.c.l.b16 %v1982
        %v2303 = vunpack.c.l.b16 %v1983
        %v2304 = vunpack.c.l.b16 %v1984
        %v2305 = vunpack.c.l.b16 %v1985
        %v2306 = vunpack.c.l.b16 %v1986
        %v2307 = vunpack.c.l.b16 %v1987
        %v2308 = vunpack.c.l.b16 %v1988
        %v2309 = vunpack.c.l.b16 %v1989
        %v2310 = vunpack.c.l.b16 %v1990
        %v2311 = vunpack.c.l.b16 %v1991
        %v2312 = vunpack.c.l.b16 %v1992
        %v2313 = vunpack.c.l.b16 %v1993
        %v2314 = vunpack.c.l.b16 %v1994
        %v2315 = vunpack.c.l.b16 %v1995
        %v2316 = vunpack.c.l.b16 %v1996
        %v2317 = vunpack.c.l.b16 %v1997
        %v2318 = vunpack.c.l.b16 %v1998
        %v2319 = vunpack.c.l.b16 %v1999
        %v2320 = vunpack.c.l.b16 %v2000
        %v2321 = vunpack.c.l.b16 %v2001
        %v2322 = vunpack.c.l.b16 %v2002
        %v2323 = vunpack.c.l.b16 %v2003
        %v2324 = vunpack.c.l.b16 %v2004
        %v2325 = vunpack.c.l.b16 %v2005
        %v2326 = vunpack.c.l.b16 %v2006
        %v2327 = vunpack.c.l.b16 %v2007
        %v2328 = vunpack.c.l.b16 %v2008
        %v2329 = vunpack.c.l.b16 %v2009
        %v2330 = vunpack.c.l.b16 %v2010
        %v2331 = vunpack.c.l.b16 %v2011
        %v2332 = vunpack.c.l.b16 %v2012
        %v2333 = vunpack.c.l.b16 %v2013
        %v2334 = vunpack.c.l.b16 %v2014
        %v2335 = vunpack.c.l.b16 %v2015
        %v2336 = vunpack.c.l.b16 %v2016
        %v2337 = vunpack.c.l.b16 %v2017
        %v2338 = vunpack.c.l.b16 %v2018
        %v2339 = vunpack.c.l.b16 %v2019
        %v2340 = vunpack.c.l.b16 %v2020
        %v2341 = vunpack.c.l.b16 %v2021
        %v2342 = vunpack.c.l.b16 %v2022
        %v2343 = vunpack.c.l.b16 %v2023
        %v2344 = vunpack.c.l.b16 %v2024
        %v2345 = vunpack.c.l.b16 %v2025
        %v2346 = vunpack.c.l.b16 %v2026
        %v2347 = vunpack.c.l.b16 %v2027
        %v2348 = vunpack.c.l.b16 %v2028
        %v2349 = vunpack.c.l.b16 %v2029
        %v2350 = vunpack.c.l.b16 %v2030
        %v2351 = vunpack.c.l.b16 %v2031
        %v2352 = vunpack.c.l.b16 %v2032
        %v2353 = vunpack.c.l.b16 %v2033
        %v2354 = vunpack.c.l.b16 %v2034
        %v2355 = vunpack.c.l.b16 %v2035
        %v2356 = vunpack.c.l.b16 %v2036
        %v2357 = vunpack.c.l.b16 %v2037
        %v2358 = vunpack.c.l.b16 %v2038
        %v2359 = vunpack.c.l.b16 %v2039
        %v2360 = vunpack.c.l.b16 %v2040
        %v2361 = vunpack.c.l.b16 %v2041
        %v2362 = vunpack.c.l.b16 %v2042
        %v2363 = vunpack.c.l.b16 %v2043
        %v2364 = vunpack.c.l.b16 %v2044
        %v2365 = vunpack.c.l.b16 %v2045
        %v2366 = vunpack.c.l.b16 %v2046
        %v2367 = vunpack.c.l.b16 %v2047
        %v2368 = vunpack.c.l.b16 %v2048
        %v2369 = vunpack.c.l.b16 %v2049
        %v2370 = vunpack.c.l.b16 %v2050
        %v2371 = vunpack.c.l.b16 %v2051
        %v2372 = vunpack.c.l.b16 %v2052
        %v2373 = vunpack.c.l.b16 %v2053
        %v2374 = vunpack.c.l.b16 %v2054
        %v2375 = vunpack.c.l.b16 %v2055
        %v2376 = vunpack.c.l.b16 %v2056
        %v2377 = vunpack.c.l.b16 %v2057
        %v2378 = vunpack.c.l.b16 %v2058
        %v2379 = vunpack.c.l.b16 %v2059
        %v2380 = vunpack.c.l.b16 %v2060
        %v2381 = vunpack.c.l.b16 %v2061
        %v2382 = vunpack.c.l.b16 %v2062
        %v2383 = vunpack.c.l.b16 %v2063
        %v2384 = vunpack.c.l.b16 %v2064
        %v2385 = vunpack.c.l.b16 %v2065
        %v2386 = vunpack.c.l.b16 %v2066
        %v2387 = vunpack.c.l.b16 %v2067
        %v2388 = vunpack.c.l.b16 %v2068
        %v2389 = vunpack.c.l.b16 %v2069
        %v2390 = vunpack.c.l.b16 %v2070
        %v2391 = vunpack.c.l.b16 %v2071
        %v2392 = vunpack.c.l.b16 %v2072
        %v2393 = vunpack.c.l.b16 %v2073
        %v2394 = vunpack.c.l.b16 %v2074
        %v2395 = vunpack.c.l.b16 %v2075
        %v2396 = vunpack.c.l.b16 %v2076
        %v2397 = vunpack.c.l.b16 %v2077
        %v2398 = vunpack.c.l.b16 %v2078
        %v2399 = vunpack.c.l.b16 %v2079
        %v2400 = vunpack.c.l.b16 %v2080
        %v2401 = vunpack.c.l.b16 %v2081
        %v2402 = vunpack.c.l.b16 %v2082
        %v2403 = vunpack.c.l.b16 %v2083
        %v2404 = vunpack.c.l.b16 %v2084
        %v2405 = vunpack.c.l.b16 %v2085
        %v2406 = vunpack.c.l.b16 %v2086
        %v2407 = vunpack.c.l.b16 %v2087
        %v2408 = vunpack.c.l.b16 %v2088
        %v2409 = vunpack.c.l.b16 %v2089
        %v2410 = vunpack.c.l.b16 %v2090
        %v2411 = vunpack.c.l.b16 %v2091
        %v2412 = vunpack.c.l.b16 %v2092
        %v2413 = vunpack.c.l.b16 %v2093
        %v2414 = vunpack.c.l.b16 %v2094
        %v2415 = vunpack.c.l.b16 %v2095
        %v2416 = vunpack.c.l.b16 %v2096
        %v2417 = vunpack.c.l.b16 %v2097
        %v2418 = vunpack.c.l.b16 %v2098
        %v2419 = vunpack.c.l.b16 %v2099
        %v2420 = vunpack.c.l.b16 %v2100
        %v2421 = vunpack.c.l.b16 %v2101
        %v2422 = vunpack.c.l.b16 %v2102
        %v2423 = vunpack.c.l.b16 %v2103
        %v2424 = vunpack.c.l.b16 %v2104
        %v2425 = vunpack.c.l.b16 %v2105
        %v2426 = vunpack.c.l.b16 %v2106
        %v2427 = vunpack.c.l.b16 %v2107
        %v2428 = vunpack.c.l.b16 %v2108
        %v2429 = vunpack.c.l.b16 %v2109
        %v2430 = vunpack.c.l.b16 %v2110
        %v2431 = vunpack.c.l.b16 %v2111
        %v2432 = vunpack.c.l.b16 %v2112
        %v2433 = vunpack.c.l.b16 %v2113
        %v2434 = vunpack.c.l.b16 %v2114
        %v2435 = vunpack.c.l.b16 %v2115
        %v2436 = vunpack.c.l.b16 %v2116
        %v2437 = vunpack.c.l.b16 %v2117
        %v2438 = vunpack.c.l.b16 %v2118
        %v2439 = vunpack.c.l.b16 %v2119
        %v2440 = vunpack.c.l.b16 %v2120
        %v2441 = vunpack.c.l.b16 %v2121
        %v2442 = vunpack.c.l.b16 %v2122
        %v2443 = vunpack.c.l.b16 %v2123
        %v2444 = vunpack.c.l.b16 %v2124
        %v2445 = vunpack.c.l.b16 %v2125
        %v2446 = vunpack.c.l.b16 %v2126
        %v2447 = vunpack.c.l.b16 %v2127
        %v2448 = vunpack.c.l.b16 %v2128
        %v2449 = vpack.c.b16 %v2290, %v2289
        %v2450 = vpack.c.b16 %v2292, %v2291
        %v2451 = vpack.c.b16 %v2294, %v2293
        %v2452 = vpack.c.b16 %v2296, %v2295
        %v2453 = vpack.c.b16 %v2298, %v2297
        %v2454 = vpack.c.b16 %v2300, %v2299
        %v2455 = vpack.c.b16 %v2302, %v2301
        %v2456 = vpack.c.b16 %v2304, %v2303
        %v2457 = vpack.c.b16 %v2306, %v2305
        %v2458 = vpack.c.b16 %v2308, %v2307
        %v2459 = vpack.c.b16 %v2310, %v2309
        %v2460 = vpack.c.b16 %v2312, %v2311
        %v2461 = vpack.c.b16 %v2314, %v2313
        %v2462 = vpack.c.b16 %v2316, %v2315
        %v2463 = vpack.c.b16 %v2318, %v2317
        %v2464 = vpack.c.b16 %v2320, %v2319
        %v2465 = vpack.c.b16 %v2322, %v2321
        %v2466 = vpack.c.b16 %v2324, %v2323
        %v2467 = vpack.c.b16 %v2326, %v2325
        %v2468 = vpack.c.b16 %v2328, %v2327
        %v2469 = vpack.c.b16 %v2330, %v2329
        %v2470 = vpack.c.b16 %v2332, %v2331
        %v2471 = vpack.c.b16 %v2334, %v2333
        %v2472 = vpack.c.b16 %v2336, %v2335
        %v2473 = vpack.c.b16 %v2338, %v2337
        %v2474 = vpack.c.b16 %v2340, %v2339
        %v2475 = vpack.c.b16 %v2342, %v2341
        %v2476 = vpack.c.b16 %v2344, %v2343
        %v2477 = vpack.c.b16 %v2346, %v2345
        %v2478 = vpack.c.b16 %v2348, %v2347
        %v2479 = vpack.c.b16 %v2350, %v2349
        %v2480 = vpack.c.b16 %v2352, %v2351
        %v2481 = vpack.c.b16 %v2354, %v2353
        %v2482 = vpack.c.b16 %v2356, %v2355
        %v2483 = vpack.c.b16 %v2358, %v2357
        %v2484 = vpack.c.b16 %v2360, %v2359
        %v2485 = vpack.c.b16 %v2362, %v2361
        %v2486 = vpack.c.b16 %v2364, %v2363
        %v2487 = vpack.c.b16 %v2366, %v2365
        %v2488 = vpack.c.b16 %v2368, %v2367
        %v2489 = vpack.c.b16 %v2370, %v2369
        %v2490 = vpack.c.b16 %v2372, %v2371
        %v2491 = vpack.c.b16 %v2374, %v2373
        %v2492 = vpack.c.b16 %v2376, %v2375
        %v2493 = vpack.c.b16 %v2378, %v2377
        %v2494 = vpack.c.b16 %v2380, %v2379
        %v2495 = vpack.c.b16 %v2382, %v2381
        %v2496 = vpack.c.b16 %v2384, %v2383
        %v2497 = vpack.c.b16 %v2386, %v2385
        %v2498 = vpack.c.b16 %v2388, %v2387
        %v2499 = vpack.c.b16 %v2390, %v2389
        %v2500 = vpack.c.b16 %v2392, %v2391
        %v2501 = vpack.c.b16 %v2394, %v2393
        %v2502 = vpack.c.b16 %v2396, %v2395
        %v2503 = vpack.c.b16 %v2398, %v2397
        %v2504 = vpack.c.b16 %v2400, %v2399
        %v2505 = vpack.c.b16 %v2402, %v2401
        %v2506 = vpack.c.b16 %v2404, %v2403
        %v2507 = vpack.c.b16 %v2406, %v2405
        %v2508 = vpack.c.b16 %v2408, %v2407
        %v2509 = vpack.c.b16 %v2410, %v2409
        %v2510 = vpack.c.b16 %v2412, %v2411
        %v2511 = vpack.c.b16 %v2414, %v2413
        %v2512 = vpack.c.b16 %v2416, %v2415
        %v2513 = vpack.c.b16 %v2418, %v2417
        %v2514 = vpack.c.b16 %v2420, %v2419
        %v2515 = vpack.c.b16 %v2422, %v2421
        %v2516 = vpack.c.b16 %v2424, %v2423
        %v2517 = vpack.c.b16 %v2426, %v2425
        %v2518 = vpack.c.b16 %v2428, %v2427
        %v2519 = vpack.c.b16 %v2430, %v2429
        %v2520 = vpack.c.b16 %v2432, %v2431
        %v2521 = vpack.c.b16 %v2434, %v2433
        %v2522 = vpack.c.b16 %v2436, %v2435
        %v2523 = vpack.c.b16 %v2438, %v2437
        %v2524 = vpack.c.b16 %v2440, %v2439
        %v2525 = vpack.c.b16 %v2442, %v2441
        %v2526 = vpack.c.b16 %v2444, %v2443
        %v2527 = vpack.c.b16 %v2446, %v2445
        %v2528 = vpack.c.b16 %v2448, %v2447
        %2609 = vmatprep.subr.bf16.mxu0 0
        %2610 = vmatpush1.bf16.msra.mxu0 %v2449
        %2611 = vmatprep.subr.bf16.mxu0 0
        %2612 = vmatpush1.bf16.msra.mxu0 %v2450
        %2613 = vmatprep.subr.bf16.mxu0 0
        %2614 = vmatpush1.bf16.msra.mxu0 %v2451
        %2615 = vmatprep.subr.bf16.mxu0 0
        %2616 = vmatpush1.bf16.msra.mxu0 %v2452
        %2617 = vmatprep.subr.bf16.mxu0 0
        %2618 = vmatpush1.bf16.msra.mxu0 %v2453
        %2619 = vmatprep.subr.bf16.mxu0 0
        %2620 = vmatpush1.bf16.msra.mxu0 %v2454
        %2621 = vmatprep.subr.bf16.mxu0 0
        %2622 = vmatpush1.bf16.msra.mxu0 %v2455
        %2623 = vmatprep.subr.bf16.mxu0 0
        %2624 = vmatpush1.bf16.msra.mxu0 %v2456
        %2625 = vmatprep.subr.bf16.mxu0 0
        %2626 = vmatpush1.bf16.msra.mxu0 %v2457
        %2627 = vmatprep.subr.bf16.mxu0 0
        %2628 = vmatpush1.bf16.msra.mxu0 %v2458
        %2629 = vmatprep.subr.bf16.mxu0 0
        %2630 = vmatpush1.bf16.msra.mxu0 %v2459
        %2631 = vmatprep.subr.bf16.mxu0 0
        %2632 = vmatpush1.bf16.msra.mxu0 %v2460
        %2633 = vmatprep.subr.bf16.mxu0 0
        %2634 = vmatpush1.bf16.msra.mxu0 %v2461
        %2635 = vmatprep.subr.bf16.mxu0 0
        %2636 = vmatpush1.bf16.msra.mxu0 %v2462
        %2637 = vmatprep.subr.bf16.mxu0 0
        %2638 = vmatpush1.bf16.msra.mxu0 %v2463
        %2639 = vmatprep.subr.bf16.mxu0 0
        %2640 = vmatpush1.bf16.msra.mxu0 %v2464
        %2641 = vmatprep.mubr.bf16.mxu0 %v1960
        %2642 = vmatmul.mubr.bf16.gmra.mrb[0].mxu0 %v1959
        %v2643 = vpop.f32.mrb[0].mxu0
        %v2644 = vadd.f32 0.0, %v2643
        %v2645 = vpop.f32.mrb[0].mxu0
        %v2646 = vpop.f32.mrb[0].mxu0
        %v2647 = vpop.f32.mrb[0].mxu0
        %2648 = vdwg.mxu0
        %2649 = vmatprep.subr.bf16.mxu0 0
        %2650 = vmatpush1.bf16.msra.mxu0 %v2465
        %2651 = vmatprep.subr.bf16.mxu0 0
        %2652 = vmatpush1.bf16.msra.mxu0 %v2466
        %2653 = vmatprep.subr.bf16.mxu0 0
        %2654 = vmatpush1.bf16.msra.mxu0 %v2467
        %2655 = vmatprep.subr.bf16.mxu0 0
        %2656 = vmatpush1.bf16.msra.mxu0 %v2468
        %2657 = vmatprep.subr.bf16.mxu0 0
        %2658 = vmatpush1.bf16.msra.mxu0 %v2469
        %2659 = vmatprep.subr.bf16.mxu0 0
        %2660 = vmatpush1.bf16.msra.mxu0 %v2470
        %2661 = vmatprep.subr.bf16.mxu0 0
        %2662 = vmatpush1.bf16.msra.mxu0 %v2471
        %2663 = vmatprep.subr.bf16.mxu0 0
        %2664 = vmatpush1.bf16.msra.mxu0 %v2472
        %2665 = vmatprep.subr.bf16.mxu0 0
        %2666 = vmatpush1.bf16.msra.mxu0 %v2473
        %2667 = vmatprep.subr.bf16.mxu0 0
        %2668 = vmatpush1.bf16.msra.mxu0 %v2474
        %2669 = vmatprep.subr.bf16.mxu0 0
        %2670 = vmatpush1.bf16.msra.mxu0 %v2475
        %2671 = vmatprep.subr.bf16.mxu0 0
        %2672 = vmatpush1.bf16.msra.mxu0 %v2476
        %2673 = vmatprep.subr.bf16.mxu0 0
        %2674 = vmatpush1.bf16.msra.mxu0 %v2477
        %2675 = vmatprep.subr.bf16.mxu0 0
        %2676 = vmatpush1.bf16.msra.mxu0 %v2478
        %2677 = vmatprep.subr.bf16.mxu0 0
        %2678 = vmatpush1.bf16.msra.mxu0 %v2479
        %2679 = vmatprep.subr.bf16.mxu0 0
        %2680 = vmatpush1.bf16.msra.mxu0 %v2480
        %2681 = vmatprep.mubr.bf16.mxu0 %v1962
        %2682 = vmatmul.mubr.bf16.gmra.mrb[0].mxu0 %v1961
        %v2683 = vpop.f32.mrb[0].mxu0
        %v2684 = vadd.f32 %v2644, %v2683
        %v2685 = vpop.f32.mrb[0].mxu0
        %v2686 = vpop.f32.mrb[0].mxu0
        %v2687 = vpop.f32.mrb[0].mxu0
        %2688 = vdwg.mxu0
        %2689 = vmatprep.subr.bf16.mxu0 0
        %2690 = vmatpush1.bf16.msra.mxu0 %v2481
        %2691 = vmatprep.subr.bf16.mxu0 0
        %2692 = vmatpush1.bf16.msra.mxu0 %v2482
        %2693 = vmatprep.subr.bf16.mxu0 0
        %2694 = vmatpush1.bf16.msra.mxu0 %v2483
        %2695 = vmatprep.subr.bf16.mxu0 0
        %2696 = vmatpush1.bf16.msra.mxu0 %v2484
        %2697 = vmatprep.subr.bf16.mxu0 0
        %2698 = vmatpush1.bf16.msra.mxu0 %v2485
        %2699 = vmatprep.subr.bf16.mxu0 0
        %2700 = vmatpush1.bf16.msra.mxu0 %v2486
        %2701 = vmatprep.subr.bf16.mxu0 0
        %2702 = vmatpush1.bf16.msra.mxu0 %v2487
        %2703 = vmatprep.subr.bf16.mxu0 0
        %2704 = vmatpush1.bf16.msra.mxu0 %v2488
        %2705 = vmatprep.subr.bf16.mxu0 0
        %2706 = vmatpush1.bf16.msra.mxu0 %v2489
        %2707 = vmatprep.subr.bf16.mxu0 0
        %2708 = vmatpush1.bf16.msra.mxu0 %v2490
        %2709 = vmatprep.subr.bf16.mxu0 0
        %2710 = vmatpush1.bf16.msra.mxu0 %v2491
        %2711 = vmatprep.subr.bf16.mxu0 0
        %2712 = vmatpush1.bf16.msra.mxu0 %v2492
        %2713 = vmatprep.subr.bf16.mxu0 0
        %2714 = vmatpush1.bf16.msra.mxu0 %v2493
        %2715 = vmatprep.subr.bf16.mxu0 0
        %2716 = vmatpush1.bf16.msra.mxu0 %v2494
        %2717 = vmatprep.subr.bf16.mxu0 0
        %2718 = vmatpush1.bf16.msra.mxu0 %v2495
        %2719 = vmatprep.subr.bf16.mxu0 0
        %2720 = vmatpush1.bf16.msra.mxu0 %v2496
        %2721 = vmatprep.mubr.bf16.mxu0 %v1964
        %2722 = vmatmul.mubr.bf16.gmra.mrb[0].mxu0 %v1963
        %v2723 = vpop.f32.mrb[0].mxu0
        %v2724 = vadd.f32 %v2684, %v2723
        %v2725 = vpop.f32.mrb[0].mxu0
        %v2726 = vpop.f32.mrb[0].mxu0
        %v2727 = vpop.f32.mrb[0].mxu0
        %2728 = vdwg.mxu0
        %2729 = vmatprep.subr.bf16.mxu0 0
        %2730 = vmatpush1.bf16.msra.mxu0 %v2497
        %2731 = vmatprep.subr.bf16.mxu0 0
        %2732 = vmatpush1.bf16.msra.mxu0 %v2498
        %2733 = vmatprep.subr.bf16.mxu0 0
        %2734 = vmatpush1.bf16.msra.mxu0 %v2499
        %2735 = vmatprep.subr.bf16.mxu0 0
        %2736 = vmatpush1.bf16.msra.mxu0 %v2500
        %2737 = vmatprep.subr.bf16.mxu0 0
        %2738 = vmatpush1.bf16.msra.mxu0 %v2501
        %2739 = vmatprep.subr.bf16.mxu0 0
        %2740 = vmatpush1.bf16.msra.mxu0 %v2502
        %2741 = vmatprep.subr.bf16.mxu0 0
        %2742 = vmatpush1.bf16.msra.mxu0 %v2503
        %2743 = vmatprep.subr.bf16.mxu0 0
        %2744 = vmatpush1.bf16.msra.mxu0 %v2504
        %2745 = vmatprep.subr.bf16.mxu0 0
        %2746 = vmatpush1.bf16.msra.mxu0 %v2505
        %2747 = vmatprep.subr.bf16.mxu0 0
        %2748 = vmatpush1.bf16.msra.mxu0 %v2506
        %2749 = vmatprep.subr.bf16.mxu0 0
        %2750 = vmatpush1.bf16.msra.mxu0 %v2507
        %2751 = vmatprep.subr.bf16.mxu0 0
        %2752 = vmatpush1.bf16.msra.mxu0 %v2508
        %2753 = vmatprep.subr.bf16.mxu0 0
        %2754 = vmatpush1.bf16.msra.mxu0 %v2509
        %2755 = vmatprep.subr.bf16.mxu0 0
        %2756 = vmatpush1.bf16.msra.mxu0 %v2510
        %2757 = vmatprep.subr.bf16.mxu0 0
        %2758 = vmatpush1.bf16.msra.mxu0 %v2511
        %2759 = vmatprep.subr.bf16.mxu0 0
        %2760 = vmatpush1.bf16.msra.mxu0 %v2512
        %2761 = vmatprep.mubr.bf16.mxu0 %v1966
        %2762 = vmatmul.mubr.bf16.gmra.mrb[0].mxu0 %v1965
        %v2763 = vpop.f32.mrb[0].mxu0
        %v2764 = vadd.f32 %v2724, %v2763
        %v2765 = vpop.f32.mrb[0].mxu0
        %v2766 = vpop.f32.mrb[0].mxu0
        %v2767 = vpop.f32.mrb[0].mxu0
        %2768 = vdwg.mxu0
        %2769 = vmatprep.subr.bf16.mxu0 0
        %2770 = vmatpush1.bf16.msra.mxu0 %v2513
        %2771 = vmatprep.subr.bf16.mxu0 0
        %2772 = vmatpush1.bf16.msra.mxu0 %v2514
        %2773 = vmatprep.subr.bf16.mxu0 0
        %2774 = vmatpush1.bf16.msra.mxu0 %v2515
        %2775 = vmatprep.subr.bf16.mxu0 0
        %2776 = vmatpush1.bf16.msra.mxu0 %v2516
        %2777 = vmatprep.subr.bf16.mxu0 0
        %2778 = vmatpush1.bf16.msra.mxu0 %v2517
        %2779 = vmatprep.subr.bf16.mxu0 0
        %2780 = vmatpush1.bf16.msra.mxu0 %v2518
        %2781 = vmatprep.subr.bf16.mxu0 0
        %2782 = vmatpush1.bf16.msra.mxu0 %v2519
        %2783 = vmatprep.subr.bf16.mxu0 0
        %2784 = vmatpush1.bf16.msra.mxu0 %v2520
        %2785 = vmatprep.subr.bf16.mxu0 0
        %2786 = vmatpush1.bf16.msra.mxu0 %v2521
        %2787 = vmatprep.subr.bf16.mxu0 0
        %2788 = vmatpush1.bf16.msra.mxu0 %v2522
        %2789 = vmatprep.subr.bf16.mxu0 0
        %2790 = vmatpush1.bf16.msra.mxu0 %v2523
        %2791 = vmatprep.subr.bf16.mxu0 0
        %2792 = vmatpush1.bf16.msra.mxu0 %v2524
        %2793 = vmatprep.subr.bf16.mxu0 0
        %2794 = vmatpush1.bf16.msra.mxu0 %v2525
        %2795 = vmatprep.subr.bf16.mxu0 0
        %2796 = vmatpush1.bf16.msra.mxu0 %v2526
        %2797 = vmatprep.subr.bf16.mxu0 0
        %2798 = vmatpush1.bf16.msra.mxu0 %v2527
        %2799 = vmatprep.subr.bf16.mxu0 0
        %2800 = vmatpush1.bf16.msra.mxu0 %v2528
        %2801 = vmatprep.mubr.bf16.mxu0 %v1968
        %2802 = vmatmul.mubr.bf16.gmra.mrb[0].mxu0 %v1967
        %v2803 = vpop.f32.mrb[0].mxu0
        %v2804 = vadd.f32 %v2764, %v2803
        %v2805 = vpop.f32.mrb[0].mxu0
        %v2806 = vpop.f32.mrb[0].mxu0
        %v2807 = vpop.f32.mrb[0].mxu0
        %2808 = vdwg.mxu0
        %v2809 = vld [vmem:[%s8] sm:$0x1]
        %v2811 = vlaneseq
        %v2812 = vshrl.u32 %v2811, 7
        %v2813 = vsub.s32 0, %v2812
        %v2814 = vrot.slane %v2809, %v2813
        %v2816 = vmul.f32 %v2804, %v2814
        %v2817 = vld [vmem:[%s9] sm:$0x1]
        %v2819 = vlaneseq
        %v2820 = vshrl.u32 %v2819, 7
        %v2821 = vsub.s32 0, %v2820
        %v2822 = vrot.slane %v2817, %v2821
        %v2824 = vadd.f32 %v2816, %v2822
        %v2825 = vmax.f32 %v2824, 0.0
        %v2826 = vpack.c.bf16 %v2825, %v2825
        %v2827 = vld [vmem:[%s10] sm:$0xf]
        %v2828 = vld [vmem:[%s10 + $0x4] sm:$0xf]
        %v2829 = vld [vmem:[%s10 + $0x8] sm:$0xf]
        %v2830 = vld [vmem:[%s10 + $0xc] sm:$0xf]
        %v2831 = vld [vmem:[%s11] sm:$0x1]
        %v2833 = vlaneseq
        %v2834 = vshrl.u32 %v2833, 7
        %v2835 = vsub.s32 0, %v2834
        %v2836 = vrot.slane %v2831, %v2835
        %v2842 = vunpack.c.l.b16 %v2827
        %v2843 = vunpack.c.l.b16 %v2828
        %v2844 = vunpack.c.l.b16 %v2829
        %v2845 = vunpack.c.l.b16 %v2830
        %v2846 = vpack.c.b16 %v2843, %v2842
        %v2847 = vpack.c.b16 %v2845, %v2844
        %v2851 = vsel %vm460, %v2826, 0
        %2853 = vmatprep.subr.bf16.mxu0 0
        %2854 = vmatpush1.bf16.msra.mxu0 %v2846
        %2855 = vmatprep.subr.bf16.mxu0 0
        %2856 = vmatpush1.bf16.msra.mxu0 %v2847
        %2857 = vmatprep.subr.bf16.mxu0 0
        %2858 = vmatpush1.bf16.msra.mxu0 0
        %2859 = vmatprep.subr.bf16.mxu0 0
        %2860 = vmatpush1.bf16.msra.mxu0 0
        %2861 = vmatprep.subr.bf16.mxu0 0
        %2862 = vmatpush1.bf16.msra.mxu0 0
        %2863 = vmatprep.subr.bf16.mxu0 0
        %2864 = vmatpush1.bf16.msra.mxu0 0
        %2865 = vmatprep.subr.bf16.mxu0 0
        %2866 = vmatpush1.bf16.msra.mxu0 0
        %2867 = vmatprep.subr.bf16.mxu0 0
        %2868 = vmatpush1.bf16.msra.mxu0 0
        %2869 = vmatprep.subr.bf16.mxu0 0
        %2870 = vmatpush1.bf16.msra.mxu0 0
        %2871 = vmatprep.subr.bf16.mxu0 0
        %2872 = vmatpush1.bf16.msra.mxu0 0
        %2873 = vmatprep.subr.bf16.mxu0 0
        %2874 = vmatpush1.bf16.msra.mxu0 0
        %2875 = vmatprep.subr.bf16.mxu0 0
        %2876 = vmatpush1.bf16.msra.mxu0 0
        %2877 = vmatprep.subr.bf16.mxu0 0
        %2878 = vmatpush1.bf16.msra.mxu0 0
        %2879 = vmatprep.subr.bf16.mxu0 0
        %2880 = vmatpush1.bf16.msra.mxu0 0
        %2881 = vmatprep.subr.bf16.mxu0 0
        %2882 = vmatpush1.bf16.msra.mxu0 0
        %2883 = vmatprep.subr.bf16.mxu0 0
        %2884 = vmatpush1.bf16.msra.mxu0 0
        %2885 = vmatprep.mubr.bf16.mxu0 0
        %2886 = vmatmul.mubr.bf16.gmra.mrb[0].mxu0 %v2851
        %v2887 = vpop.f32.mrb[0].mxu0
        %v2888 = vadd.f32 %v2836, %v2887
        %v2889 = vpop.f32.mrb[0].mxu0
        %v2890 = vpop.f32.mrb[0].mxu0
        %v2891 = vpop.f32.mrb[0].mxu0
        %2892 = vdwg.mxu0
        %2893 = vst [vmem:[%s419] sm:$0xff] %v2888
        %s2894 = sand.u32 %s292, 1
        %s2895 = scalar_lea.sflag [#allocation4], %s2894
        %s2896 = sand.u32 %s292, 1
        %s2897 = smul.addr %s2896, 8
        %s2898 = scalar_lea.vmem [#allocation5], %s2897
        // Predicated region
        $region73: #{tpu_custom_call.1} parent=67 // pred_check
          %p2899 = pneg %p302
        $region74: #{tpu_custom_call.1} parent=67 // pred_check_branch
          %2901 = sbr.rel (%p2899) target = $region76
        $region75: #{tpu_custom_call.1} parent=67 // pred_region
          %s2903 = ssub.s32 128, 128
          %2904 = vsyncadd %s2895, %s2903
          %s2905 = smul.addr %s27, 128
          %s2906 = scalar_lea.hbm %s12, %s2905
          %s2908 = sshll.u32 %s2898, 4
          %s2909 = int_to_ptr.vmem [resolvable:$true] %s2908
          %2911 = dma.vmem_to_hbm [thread:$0]  %s2909, 128, %s2906, %s2895
        $region76: #{tpu_custom_call.1} parent=67 // pred_fallthru
          _
      $region68: #{tpu_custom_call.1} parent=5 // pred_fallthru
        _
      %p2912 = scmp.le.s32.totalorder 2, %s22
      // Predicated region
      $region77: #{tpu_custom_call.1} parent=5 // pred_check
        %p2913 = pneg %p2912
      $region78: #{tpu_custom_call.1} parent=5 // pred_check_branch
        %2915 = sbr.rel (%p2913) target = $region80
      $region79: #{tpu_custom_call.1} parent=5 // pred_region
        %s2916 = ssub.s32 %s22, 2
        // Predicated region
        $region81: #{tpu_custom_call.1} parent=79 // pred_check
          %p2917 = pneg %p308
        $region82: #{tpu_custom_call.1} parent=79 // pred_check_branch
          %2919 = sbr.rel (%p2917) target = $region84
        $region83: #{tpu_custom_call.1} parent=79 // pred_region
          %s2920 = sand.u32 %s293, 1
          %s2921 = scalar_lea.sflag [#allocation4], %s2920
          %s2922 = sand.u32 %s293, 1
          %s2923 = smul.addr %s2922, 8
          %s2924 = scalar_lea.vmem [#allocation5], %s2923
          %2925 = dma.done %s2921, 128
        $region84: #{tpu_custom_call.1} parent=79 // pred_fallthru
          _
      $region80: #{tpu_custom_call.1} parent=5 // pred_fallthru
        _
    $region6: #{tpu_custom_call.1} parent=1 // loop_footer
      %s26 = sadd.s32 1, %s22
    $region7: #{tpu_custom_call.1} parent=1 // loop_footer_branch
      %21 = sbr.rel target = $region3
    $region8: #{tpu_custom_call.1} parent=1 // loop_exit
      _
    %2926 = vsyncpa [#allocation3], 1
    %s2927 = scalar_lea.sflag [#allocation3], 1
    %2928 = vsyncpa %s2927, 1
    %2929 = vsyncpa [#allocation4], 1
    %s2930 = scalar_lea.sflag [#allocation4], 1
    %2931 = vsyncpa %s2930, 1

</llo_original>
